<compile_context>
chip_gen: v5e
topology: v5e:2x2
jax: 0.10.0
libtpu: 0.0.40
codegen_flags: <defaults>
</compile_context>

<pallas_src>
import jax
import jax.numpy as jnp
from jax.experimental import pallas as pl
from jax.experimental.pallas import tpu as pltpu

# ----- model hyper-params (small, consistent with the module defaults) -----
DIM = 32                              # input feature dim
EXPANSION = 2
DIM_HIDDEN = DIM * EXPANSION          # 64  (dim_hidden default = dim * expansion)
DIM_INNER = DIM_HIDDEN * EXPANSION    # 128
DEPTH = 3
STREAMS = 4                           # num_residual_streams
BATCH = 16                            # batch size
BLOCK_B = BATCH                       # whole batch per grid step -> grid = (1,)
T_ALPHA = STREAMS + 1                 # 5 alpha (stream-mixing) columns
BETA_COL = T_ALPHA                    # beta column index in the fused projection
NCOL = 8                              # padded projection width (5 alpha + 1 beta + 2 zero)
EPS = 1.1920929e-07                   # torch nn.RMSNorm(eps=None) -> finfo(f32).eps


def _rmsnorm(x, w):
    var = jnp.mean(x * x, axis=-1, keepdims=True)
    return x * jax.lax.rsqrt(var + EPS) * w


def _relu_squared(x):
    # sign(x) * relu(x)^2 == relu(x)^2
    r = jnp.maximum(x, 0.0)
    return r * r


def simba_kernel(
    x_ref,             # (BB, DIM)
    w_in_ref,          # (DIM, H)
    b_in_ref,          # (1, H)
    hc_norm_w_ref,     # (DEPTH, H)
    dyn_proj_ref,      # (DEPTH, H, NCOL)   cols = [alpha_0..alpha_4 | beta | 0 | 0]
    dyn_scale_ref,     # (DEPTH, 1, NCOL)
    static_full_ref,   # (DEPTH, S*BB, NCOL) per-stream static rows repeated BB times
    br_norm_w_ref,     # (DEPTH, H)
    w1_ref,            # (DEPTH, H, INNER)
    b1_ref,            # (DEPTH, INNER)
    w2_ref,            # (DEPTH, INNER, H)
    b2_ref,            # (DEPTH, H)
    final_norm_w_ref,  # (1, H)
    out_ref,           # (BB, H)
):
    BB = x_ref.shape[0]
    H, S = DIM_HIDDEN, STREAMS

    def branch(v, l):
        # RMSNorm -> Linear -> ReluSquared -> Linear  (Dropout(p=0) == identity)
        bh = _rmsnorm(v, br_norm_w_ref[l][None, :])
        bh = jnp.dot(bh, w1_ref[l], preferred_element_type=jnp.float32) + b1_ref[l][None, :]
        bh = _relu_squared(bh)
        bh = jnp.dot(bh, w2_ref[l], preferred_element_type=jnp.float32) + b2_ref[l][None, :]
        return bh

    # proj_in : Linear(dim, dim_hidden)
    h = jnp.dot(x_ref[...], w_in_ref[...],
                preferred_element_type=jnp.float32) + b_in_ref[...]

    # ---------------- layer 0: all residual streams are identical (== h) ----
    normed0 = _rmsnorm(h, hc_norm_w_ref[0][None, :])
    dyn0 = jnp.tanh(jnp.dot(normed0, dyn_proj_ref[0],
                            preferred_element_type=jnp.float32)) * dyn_scale_ref[0]  # (BB, NCOL)
    st0 = static_full_ref[0]                                         # (S*BB, NCOL)
    st0_blk = [st0[s * BB:(s + 1) * BB, :] for s in range(S)]
    st0_colsum = st0_blk[0] + st0_blk[1] + st0_blk[2] + st0_blk[3]   # (BB, NCOL)
    # coef[:, t] = sum_s alpha[b, s, t]   (streams identical -> factor out h)
    coef = float(S) * dyn0 + st0_colsum

    bh = branch(coef[:, 0:1] * h, 0)
    res = []
    for s in range(S):
        beta_s = dyn0[:, BETA_COL:BETA_COL + 1] + st0_blk[s][:, BETA_COL:BETA_COL + 1]
        res.append(coef[:, s + 1:s + 2] * h + beta_s * bh)

    # ---------------- layers 1 .. DEPTH-1 ------------------------------------
    for l in range(1, DEPTH):
        # width connection: one RMSNorm + ONE MXU matmul over all streams
        res_flat = jnp.concatenate(res, axis=0)                      # (S*BB, H), stream-major
        normed = _rmsnorm(res_flat, hc_norm_w_ref[l][None, :])
        ab = (jnp.tanh(jnp.dot(normed, dyn_proj_ref[l],
                               preferred_element_type=jnp.float32)) * dyn_scale_ref[l]
              + static_full_ref[l])                                  # (S*BB, NCOL)

        # stream mixing: unrolled broadcast-FMAs on the VPU (no batched dot_general)
        mix = []
        for t in range(T_ALPHA):
            acc = ab[0:BB, t:t + 1] * res[0]
            for s in range(1, S):
                acc = acc + ab[s * BB:(s + 1) * BB, t:t + 1] * res[s]
            mix.append(acc)

        bh = branch(mix[0], l)

        # depth connection
        res = [mix[s + 1] + ab[s * BB:(s + 1) * BB, BETA_COL:BETA_COL + 1] * bh
               for s in range(S)]

    # reduce_stream (sum over streams) + final RMSNorm
    reduced = res[0] + res[1] + res[2] + res[3]
    out_ref[...] = _rmsnorm(reduced, final_norm_w_ref[...])


def _whole_spec(shape):
    zeros = (0,) * len(shape)
    return pl.BlockSpec(shape, lambda i, _z=zeros: _z)


@jax.jit
def simba_forward(x, params):
    B = x.shape[0]
    pad_w = NCOL - T_ALPHA - 1

    # Fuse the dynamic alpha projections and the beta projection into one
    # (H, NCOL) matrix per layer, zero-padded to a sublane-friendly width.
    dyn_proj = jnp.concatenate(
        [jnp.transpose(params["dyn_alpha_fn_t"], (0, 2, 1)),            # (D, H, T)
         params["dyn_beta_fn"][..., None],                              # (D, H, 1)
         jnp.zeros((DEPTH, DIM_HIDDEN, pad_w), jnp.float32)], axis=-1)  # (D, H, NCOL)
    dyn_scale = jnp.concatenate(
        [jnp.broadcast_to(params["dyn_alpha_scale"][:, None], (DEPTH, T_ALPHA)),
         params["dyn_beta_scale"][:, None],
         jnp.zeros((DEPTH, pad_w), jnp.float32)], axis=-1)[:, None, :]  # (D, 1, NCOL)
    static_comb = jnp.concatenate(
        [params["static_alpha"], params["static_beta"][..., None],
         jnp.zeros((DEPTH, STREAMS, pad_w), jnp.float32)], axis=-1)     # (D, S, NCOL)
    # repeat each stream's static row BLOCK_B times -> stream-major (S*BB, NCOL)
    static_full = jnp.repeat(static_comb, BLOCK_B, axis=1)              # (D, S*BB, NCOL)

    operands = (
        x, params["w_in"], params["b_in"], params["hc_norm_w"],
        dyn_proj, dyn_scale, static_full, params["br_norm_w"],
        params["w1"], params["b1"], params["w2"], params["b2"],
        params["final_norm_w"],
    )

    in_specs = [pl.BlockSpec((BLOCK_B, DIM), lambda i: (i, 0))] + \
               [_whole_spec(a.shape) for a in operands[1:]]

    return pl.pallas_call(
        simba_kernel,
        grid=(B // BLOCK_B,),                    # == 1 for BATCH=16
        in_specs=in_specs,
        out_specs=pl.BlockSpec((BLOCK_B, DIM_HIDDEN), lambda i: (i, 0)),
        out_shape=jax.ShapeDtypeStruct((B, DIM_HIDDEN), jnp.float32),
        compiler_params=pltpu.CompilerParams(
            dimension_semantics=("arbitrary",)),
    )(*operands)


# ---------------------------- pure-JAX reference ----------------------------
def simba_ref(x, p):
    h = x @ p["w_in"] + p["b_in"][0]
    res = jnp.broadcast_to(h[:, None, :], (x.shape[0], STREAMS, DIM_HIDDEN))
    for l in range(DEPTH):
        normed = _rmsnorm(res, p["hc_norm_w"][l])
        wc = jnp.tanh(jnp.einsum("bsd,td->bst", normed, p["dyn_alpha_fn_t"][l]))
        alpha = wc * p["dyn_alpha_scale"][l] + p["static_alpha"][l]
        dc = jnp.tanh(jnp.einsum("bsd,d->bs", normed, p["dyn_beta_fn"][l]))
        beta = dc * p["dyn_beta_scale"][l] + p["static_beta"][l]
        mix = jnp.einsum("bst,bsd->btd", alpha, res)
        branch_in, res = mix[:, 0], mix[:, 1:]
        bh = _rmsnorm(branch_in, p["br_norm_w"][l])
        bh = bh @ p["w1"][l] + p["b1"][l]
        bh = jnp.maximum(bh, 0.0) ** 2
        bh = bh @ p["w2"][l] + p["b2"][l]
        res = res + beta[:, :, None] * bh[:, None, :]
    return _rmsnorm(res.sum(axis=1), p["final_norm_w"][0])


def make_params(key):
    def uniform(k, shape, bound):
        return jax.random.uniform(k, shape, jnp.float32, -bound, bound)

    ks = jax.random.split(key, 10)
    eye = jnp.eye(STREAMS, dtype=jnp.float32)
    static_alpha = jnp.stack(
        [jnp.concatenate(
            [jax.nn.one_hot(l % STREAMS, STREAMS, dtype=jnp.float32)[:, None], eye], axis=1)
         for l in range(DEPTH)], axis=0)                                   # (D, S, S+1)

    p = {
        "w_in": uniform(ks[0], (DIM, DIM_HIDDEN), 1.0 / (DIM ** 0.5)),
        "b_in": uniform(ks[1], (1, DIM_HIDDEN), 1.0 / (DIM ** 0.5)),
        "hc_norm_w": jnp.ones((DEPTH, DIM_HIDDEN), jnp.float32),
        "static_alpha": static_alpha,
        "static_beta": jnp.ones((DEPTH, STREAMS), jnp.float32),
        # torch inits these to zero; small random values keep the path nontrivial.
        "dyn_alpha_fn_t": 0.02 * jax.random.normal(ks[2], (DEPTH, STREAMS + 1, DIM_HIDDEN), jnp.float32),
        "dyn_alpha_scale": jnp.full((DEPTH,), 1e-2, jnp.float32),
        "dyn_beta_fn": 0.02 * jax.random.normal(ks[3], (DEPTH, DIM_HIDDEN), jnp.float32),
        "dyn_beta_scale": jnp.full((DEPTH,), 1e-2, jnp.float32),
        "br_norm_w": jnp.ones((DEPTH, DIM_HIDDEN), jnp.float32),
        "w1": uniform(ks[4], (DEPTH, DIM_HIDDEN, DIM_INNER), 1.0 / (DIM_HIDDEN ** 0.5)),
        "b1": uniform(ks[5], (DEPTH, DIM_INNER), 1.0 / (DIM_HIDDEN ** 0.5)),
        "w2": uniform(ks[6], (DEPTH, DIM_INNER, DIM_HIDDEN), 1.0 / (DIM_INNER ** 0.5)),
        "b2": uniform(ks[7], (DEPTH, DIM_HIDDEN), 1.0 / (DIM_INNER ** 0.5)),
        "final_norm_w": jnp.ones((1, DIM_HIDDEN), jnp.float32),
    }
    return p, ks[8]


if __name__ == "__main__":
    params, kx = make_params(jax.random.PRNGKey(0))
    x = jax.random.normal(kx, (BATCH, DIM), jnp.float32)

    out = simba_forward(x, params)
    out = jax.block_until_ready(out)

    ref = simba_ref(x, params)
    assert out.shape == (BATCH, DIM_HIDDEN)
    assert jnp.allclose(out, ref, rtol=1e-4, atol=1e-4), "mismatch vs reference"
    print("KERNEL_OK")
</pallas_src>

<mosaic_0001>
module attributes {stable_mosaic.version = 11 : i64} {
  func.func @simba_kernel(%arg0: i32, %arg1: memref<16x32xf32, #tpu.memory_space<vmem>>, %arg2: memref<32x64xf32, #tpu.memory_space<vmem>>, %arg3: memref<1x64xf32, #tpu.memory_space<vmem>>, %arg4: memref<3x64xf32, #tpu.memory_space<vmem>>, %arg5: memref<3x64x8xf32, #tpu.memory_space<vmem>>, %arg6: memref<3x1x8xf32, #tpu.memory_space<vmem>>, %arg7: memref<3x64x8xf32, #tpu.memory_space<vmem>>, %arg8: memref<3x64xf32, #tpu.memory_space<vmem>>, %arg9: memref<3x64x128xf32, #tpu.memory_space<vmem>>, %arg10: memref<3x128xf32, #tpu.memory_space<vmem>>, %arg11: memref<3x128x64xf32, #tpu.memory_space<vmem>>, %arg12: memref<3x64xf32, #tpu.memory_space<vmem>>, %arg13: memref<1x64xf32, #tpu.memory_space<vmem>>, %arg14: memref<16x64xf32, #tpu.memory_space<vmem>>) attributes {dimension_semantics = [#tpu.dimension_semantics<arbitrary>], iteration_bounds = array<i64: 1>, scalar_prefetch = 0 : i64, scratch_operands = 0 : i64, tpu.core_type = #tpu.core_type<tc>, window_params = [{transform_indices = @transform_0, window_bounds = array<i64: 16, 32>}, {pipeline_mode = #tpu.pipeline_mode<synchronous>, transform_indices = @transform_1, window_bounds = array<i64: 32, 64>}, {pipeline_mode = #tpu.pipeline_mode<synchronous>, transform_indices = @transform_2, window_bounds = array<i64: 1, 64>}, {pipeline_mode = #tpu.pipeline_mode<synchronous>, transform_indices = @transform_3, window_bounds = array<i64: 3, 64>}, {pipeline_mode = #tpu.pipeline_mode<synchronous>, transform_indices = @transform_4, window_bounds = array<i64: 3, 64, 8>}, {pipeline_mode = #tpu.pipeline_mode<synchronous>, transform_indices = @transform_5, window_bounds = array<i64: 3, 1, 8>}, {pipeline_mode = #tpu.pipeline_mode<synchronous>, transform_indices = @transform_6, window_bounds = array<i64: 3, 64, 8>}, {pipeline_mode = #tpu.pipeline_mode<synchronous>, transform_indices = @transform_7, window_bounds = array<i64: 3, 64>}, {pipeline_mode = #tpu.pipeline_mode<synchronous>, transform_indices = @transform_8, window_bounds = array<i64: 3, 64, 128>}, {pipeline_mode = #tpu.pipeline_mode<synchronous>, transform_indices = @transform_9, window_bounds = array<i64: 3, 128>}, {pipeline_mode = #tpu.pipeline_mode<synchronous>, transform_indices = @transform_10, window_bounds = array<i64: 3, 128, 64>}, {pipeline_mode = #tpu.pipeline_mode<synchronous>, transform_indices = @transform_11, window_bounds = array<i64: 3, 64>}, {pipeline_mode = #tpu.pipeline_mode<synchronous>, transform_indices = @transform_12, window_bounds = array<i64: 1, 64>}, {transform_indices = @transform_13, window_bounds = array<i64: 16, 64>}]} {
    %c0 = arith.constant 0 : index
    %c0_0 = arith.constant 0 : index
    %0 = vector.load %arg1[%c0, %c0_0] : memref<16x32xf32, #tpu.memory_space<vmem>>, vector<16x32xf32>
    %c0_1 = arith.constant 0 : index
    %c0_2 = arith.constant 0 : index
    %1 = vector.load %arg2[%c0_1, %c0_2] : memref<32x64xf32, #tpu.memory_space<vmem>>, vector<32x64xf32>
    %cst = arith.constant dense<0.000000e+00> : vector<16x64xf32>
    %2 = tpu.matmul %0, %1, %cst {dimension_numbers = #tpu.dot_dimension_numbers<[1], [0], [0], [1], [0, 0, 1, 1], [], []>} : vector<16x32xf32>, vector<32x64xf32>, vector<16x64xf32> -> vector<16x64xf32>
    %c0_3 = arith.constant 0 : index
    %c0_4 = arith.constant 0 : index
    %3 = vector.load %arg3[%c0_3, %c0_4] : memref<1x64xf32, #tpu.memory_space<vmem>>, vector<1x64xf32>
    %4 = vector.broadcast %3 : vector<1x64xf32> to vector<16x64xf32>
    %5 = arith.addf %2, %4 : vector<16x64xf32>
    %c0_5 = arith.constant 0 : index
    %c0_6 = arith.constant 0 : index
    %6 = vector.load %arg4[%c0_5, %c0_6] : memref<3x64xf32, #tpu.memory_space<vmem>>, vector<1x64xf32>
    %7 = vector.shape_cast %6 : vector<1x64xf32> to vector<64xf32>
    %8 = vector.shape_cast %7 : vector<64xf32> to vector<1x64xf32>
    %9 = arith.mulf %5, %5 : vector<16x64xf32>
    %cst_7 = arith.constant dense<0.000000e+00> : vector<16xf32>
    %10 = vector.multi_reduction <add>, %9, %cst_7 [1] : vector<16x64xf32> to vector<16xf32>
    %11 = vector.shape_cast %10 : vector<16xf32> to vector<16x1xf32>
    %cst_8 = arith.constant 6.400000e+01 : f32
    %12 = vector.broadcast %cst_8 : f32 to vector<16x1xf32>
    %13 = arith.divf %11, %12 : vector<16x1xf32>
    %cst_9 = arith.constant 1.1920929E-7 : f32
    %14 = vector.broadcast %cst_9 : f32 to vector<16x1xf32>
    %15 = arith.addf %13, %14 : vector<16x1xf32>
    %16 = math.rsqrt %15 : vector<16x1xf32>
    %17 = vector.broadcast %16 : vector<16x1xf32> to vector<16x64xf32>
    %18 = arith.mulf %5, %17 : vector<16x64xf32>
    %19 = vector.broadcast %8 : vector<1x64xf32> to vector<16x64xf32>
    %20 = arith.mulf %18, %19 : vector<16x64xf32>
    %c0_10 = arith.constant 0 : index
    %c0_11 = arith.constant 0 : index
    %c0_12 = arith.constant 0 : index
    %21 = vector.load %arg5[%c0_10, %c0_11, %c0_12] : memref<3x64x8xf32, #tpu.memory_space<vmem>>, vector<1x64x8xf32>
    %22 = vector.shape_cast %21 : vector<1x64x8xf32> to vector<64x8xf32>
    %cst_13 = arith.constant dense<0.000000e+00> : vector<16x8xf32>
    %23 = tpu.matmul %20, %22, %cst_13 {dimension_numbers = #tpu.dot_dimension_numbers<[1], [0], [0], [1], [0, 0, 1, 1], [], []>} : vector<16x64xf32>, vector<64x8xf32>, vector<16x8xf32> -> vector<16x8xf32>
    %24 = math.tanh %23 : vector<16x8xf32>
    %c0_14 = arith.constant 0 : index
    %c0_15 = arith.constant 0 : index
    %c0_16 = arith.constant 0 : index
    %25 = vector.load %arg6[%c0_14, %c0_15, %c0_16] : memref<3x1x8xf32, #tpu.memory_space<vmem>>, vector<1x1x8xf32>
    %26 = vector.shape_cast %25 : vector<1x1x8xf32> to vector<1x8xf32>
    %27 = vector.broadcast %26 : vector<1x8xf32> to vector<16x8xf32>
    %28 = arith.mulf %24, %27 : vector<16x8xf32>
    %c0_17 = arith.constant 0 : index
    %c0_18 = arith.constant 0 : index
    %c0_19 = arith.constant 0 : index
    %29 = vector.load %arg7[%c0_17, %c0_18, %c0_19] : memref<3x64x8xf32, #tpu.memory_space<vmem>>, vector<1x64x8xf32>
    %30 = vector.shape_cast %29 : vector<1x64x8xf32> to vector<64x8xf32>
    %31 = vector.extract_strided_slice %30 {offsets = [0, 0], sizes = [16, 8], strides = [1, 1]} : vector<64x8xf32> to vector<16x8xf32>
    %32 = vector.extract_strided_slice %30 {offsets = [16, 0], sizes = [16, 8], strides = [1, 1]} : vector<64x8xf32> to vector<16x8xf32>
    %33 = vector.extract_strided_slice %30 {offsets = [32, 0], sizes = [16, 8], strides = [1, 1]} : vector<64x8xf32> to vector<16x8xf32>
    %34 = vector.extract_strided_slice %30 {offsets = [48, 0], sizes = [16, 8], strides = [1, 1]} : vector<64x8xf32> to vector<16x8xf32>
    %35 = arith.addf %31, %32 : vector<16x8xf32>
    %36 = arith.addf %35, %33 : vector<16x8xf32>
    %37 = arith.addf %36, %34 : vector<16x8xf32>
    %cst_20 = arith.constant 4.000000e+00 : f32
    %38 = vector.broadcast %cst_20 : f32 to vector<16x8xf32>
    %39 = arith.mulf %38, %28 : vector<16x8xf32>
    %40 = arith.addf %39, %37 : vector<16x8xf32>
    %41 = vector.extract_strided_slice %40 {offsets = [0, 0], sizes = [16, 1], strides = [1, 1]} : vector<16x8xf32> to vector<16x1xf32>
    %42 = vector.broadcast %41 : vector<16x1xf32> to vector<16x64xf32>
    %43 = arith.mulf %42, %5 : vector<16x64xf32>
    %c0_21 = arith.constant 0 : index
    %c0_22 = arith.constant 0 : index
    %44 = vector.load %arg8[%c0_21, %c0_22] : memref<3x64xf32, #tpu.memory_space<vmem>>, vector<1x64xf32>
    %45 = vector.shape_cast %44 : vector<1x64xf32> to vector<64xf32>
    %46 = vector.shape_cast %45 : vector<64xf32> to vector<1x64xf32>
    %47 = arith.mulf %43, %43 : vector<16x64xf32>
    %cst_23 = arith.constant dense<0.000000e+00> : vector<16xf32>
    %48 = vector.multi_reduction <add>, %47, %cst_23 [1] : vector<16x64xf32> to vector<16xf32>
    %49 = vector.shape_cast %48 : vector<16xf32> to vector<16x1xf32>
    %cst_24 = arith.constant 6.400000e+01 : f32
    %50 = vector.broadcast %cst_24 : f32 to vector<16x1xf32>
    %51 = arith.divf %49, %50 : vector<16x1xf32>
    %cst_25 = arith.constant 1.1920929E-7 : f32
    %52 = vector.broadcast %cst_25 : f32 to vector<16x1xf32>
    %53 = arith.addf %51, %52 : vector<16x1xf32>
    %54 = math.rsqrt %53 : vector<16x1xf32>
    %55 = vector.broadcast %54 : vector<16x1xf32> to vector<16x64xf32>
    %56 = arith.mulf %43, %55 : vector<16x64xf32>
    %57 = vector.broadcast %46 : vector<1x64xf32> to vector<16x64xf32>
    %58 = arith.mulf %56, %57 : vector<16x64xf32>
    %c0_26 = arith.constant 0 : index
    %c0_27 = arith.constant 0 : index
    %c0_28 = arith.constant 0 : index
    %59 = vector.load %arg9[%c0_26, %c0_27, %c0_28] : memref<3x64x128xf32, #tpu.memory_space<vmem>>, vector<1x64x128xf32>
    %60 = vector.shape_cast %59 : vector<1x64x128xf32> to vector<64x128xf32>
    %cst_29 = arith.constant dense<0.000000e+00> : vector<16x128xf32>
    %61 = tpu.matmul %58, %60, %cst_29 {dimension_numbers = #tpu.dot_dimension_numbers<[1], [0], [0], [1], [0, 0, 1, 1], [], []>} : vector<16x64xf32>, vector<64x128xf32>, vector<16x128xf32> -> vector<16x128xf32>
    %c0_30 = arith.constant 0 : index
    %c0_31 = arith.constant 0 : index
    %62 = vector.load %arg10[%c0_30, %c0_31] : memref<3x128xf32, #tpu.memory_space<vmem>>, vector<1x128xf32>
    %63 = vector.shape_cast %62 : vector<1x128xf32> to vector<128xf32>
    %64 = vector.shape_cast %63 : vector<128xf32> to vector<1x128xf32>
    %65 = vector.broadcast %64 : vector<1x128xf32> to vector<16x128xf32>
    %66 = arith.addf %61, %65 : vector<16x128xf32>
    %cst_32 = arith.constant 0.000000e+00 : f32
    %67 = vector.broadcast %cst_32 : f32 to vector<16x128xf32>
    %68 = arith.maximumf %66, %67 : vector<16x128xf32>
    %69 = arith.mulf %68, %68 : vector<16x128xf32>
    %c0_33 = arith.constant 0 : index
    %c0_34 = arith.constant 0 : index
    %c0_35 = arith.constant 0 : index
    %70 = vector.load %arg11[%c0_33, %c0_34, %c0_35] : memref<3x128x64xf32, #tpu.memory_space<vmem>>, vector<1x128x64xf32>
    %71 = vector.shape_cast %70 : vector<1x128x64xf32> to vector<128x64xf32>
    %cst_36 = arith.constant dense<0.000000e+00> : vector<16x64xf32>
    %72 = tpu.matmul %69, %71, %cst_36 {dimension_numbers = #tpu.dot_dimension_numbers<[1], [0], [0], [1], [0, 0, 1, 1], [], []>} : vector<16x128xf32>, vector<128x64xf32>, vector<16x64xf32> -> vector<16x64xf32>
    %c0_37 = arith.constant 0 : index
    %c0_38 = arith.constant 0 : index
    %73 = vector.load %arg12[%c0_37, %c0_38] : memref<3x64xf32, #tpu.memory_space<vmem>>, vector<1x64xf32>
    %74 = vector.shape_cast %73 : vector<1x64xf32> to vector<64xf32>
    %75 = vector.shape_cast %74 : vector<64xf32> to vector<1x64xf32>
    %76 = vector.broadcast %75 : vector<1x64xf32> to vector<16x64xf32>
    %77 = arith.addf %72, %76 : vector<16x64xf32>
    %78 = vector.extract_strided_slice %28 {offsets = [0, 5], sizes = [16, 1], strides = [1, 1]} : vector<16x8xf32> to vector<16x1xf32>
    %79 = vector.extract_strided_slice %31 {offsets = [0, 5], sizes = [16, 1], strides = [1, 1]} : vector<16x8xf32> to vector<16x1xf32>
    %80 = arith.addf %78, %79 : vector<16x1xf32>
    %81 = vector.extract_strided_slice %40 {offsets = [0, 1], sizes = [16, 1], strides = [1, 1]} : vector<16x8xf32> to vector<16x1xf32>
    %82 = vector.broadcast %81 : vector<16x1xf32> to vector<16x64xf32>
    %83 = arith.mulf %82, %5 : vector<16x64xf32>
    %84 = vector.broadcast %80 : vector<16x1xf32> to vector<16x64xf32>
    %85 = arith.mulf %84, %77 : vector<16x64xf32>
    %86 = arith.addf %83, %85 : vector<16x64xf32>
    %87 = vector.extract_strided_slice %28 {offsets = [0, 5], sizes = [16, 1], strides = [1, 1]} : vector<16x8xf32> to vector<16x1xf32>
    %88 = vector.extract_strided_slice %32 {offsets = [0, 5], sizes = [16, 1], strides = [1, 1]} : vector<16x8xf32> to vector<16x1xf32>
    %89 = arith.addf %87, %88 : vector<16x1xf32>
    %90 = vector.extract_strided_slice %40 {offsets = [0, 2], sizes = [16, 1], strides = [1, 1]} : vector<16x8xf32> to vector<16x1xf32>
    %91 = vector.broadcast %90 : vector<16x1xf32> to vector<16x64xf32>
    %92 = arith.mulf %91, %5 : vector<16x64xf32>
    %93 = vector.broadcast %89 : vector<16x1xf32> to vector<16x64xf32>
    %94 = arith.mulf %93, %77 : vector<16x64xf32>
    %95 = arith.addf %92, %94 : vector<16x64xf32>
    %96 = vector.extract_strided_slice %28 {offsets = [0, 5], sizes = [16, 1], strides = [1, 1]} : vector<16x8xf32> to vector<16x1xf32>
    %97 = vector.extract_strided_slice %33 {offsets = [0, 5], sizes = [16, 1], strides = [1, 1]} : vector<16x8xf32> to vector<16x1xf32>
    %98 = arith.addf %96, %97 : vector<16x1xf32>
    %99 = vector.extract_strided_slice %40 {offsets = [0, 3], sizes = [16, 1], strides = [1, 1]} : vector<16x8xf32> to vector<16x1xf32>
    %100 = vector.broadcast %99 : vector<16x1xf32> to vector<16x64xf32>
    %101 = arith.mulf %100, %5 : vector<16x64xf32>
    %102 = vector.broadcast %98 : vector<16x1xf32> to vector<16x64xf32>
    %103 = arith.mulf %102, %77 : vector<16x64xf32>
    %104 = arith.addf %101, %103 : vector<16x64xf32>
    %105 = vector.extract_strided_slice %28 {offsets = [0, 5], sizes = [16, 1], strides = [1, 1]} : vector<16x8xf32> to vector<16x1xf32>
    %106 = vector.extract_strided_slice %34 {offsets = [0, 5], sizes = [16, 1], strides = [1, 1]} : vector<16x8xf32> to vector<16x1xf32>
    %107 = arith.addf %105, %106 : vector<16x1xf32>
    %108 = vector.extract_strided_slice %40 {offsets = [0, 4], sizes = [16, 1], strides = [1, 1]} : vector<16x8xf32> to vector<16x1xf32>
    %109 = vector.broadcast %108 : vector<16x1xf32> to vector<16x64xf32>
    %110 = arith.mulf %109, %5 : vector<16x64xf32>
    %111 = vector.broadcast %107 : vector<16x1xf32> to vector<16x64xf32>
    %112 = arith.mulf %111, %77 : vector<16x64xf32>
    %113 = arith.addf %110, %112 : vector<16x64xf32>
    %114 = tpu.concatenate %86, %95, %104, %113 in 0 : vector<16x64xf32>, vector<16x64xf32>, vector<16x64xf32>, vector<16x64xf32> -> vector<64x64xf32>
    %c1 = arith.constant 1 : index
    %c0_39 = arith.constant 0 : index
    %115 = vector.load %arg4[%c1, %c0_39] : memref<3x64xf32, #tpu.memory_space<vmem>>, vector<1x64xf32>
    %116 = vector.shape_cast %115 : vector<1x64xf32> to vector<64xf32>
    %117 = vector.shape_cast %116 : vector<64xf32> to vector<1x64xf32>
    %118 = arith.mulf %114, %114 : vector<64x64xf32>
    %cst_40 = arith.constant dense<0.000000e+00> : vector<64xf32>
    %119 = vector.multi_reduction <add>, %118, %cst_40 [1] : vector<64x64xf32> to vector<64xf32>
    %120 = vector.shape_cast %119 : vector<64xf32> to vector<64x1xf32>
    %cst_41 = arith.constant 6.400000e+01 : f32
    %121 = vector.broadcast %cst_41 : f32 to vector<64x1xf32>
    %122 = arith.divf %120, %121 : vector<64x1xf32>
    %cst_42 = arith.constant 1.1920929E-7 : f32
    %123 = vector.broadcast %cst_42 : f32 to vector<64x1xf32>
    %124 = arith.addf %122, %123 : vector<64x1xf32>
    %125 = math.rsqrt %124 : vector<64x1xf32>
    %126 = vector.broadcast %125 : vector<64x1xf32> to vector<64x64xf32>
    %127 = arith.mulf %114, %126 : vector<64x64xf32>
    %128 = vector.broadcast %117 : vector<1x64xf32> to vector<64x64xf32>
    %129 = arith.mulf %127, %128 : vector<64x64xf32>
    %c1_43 = arith.constant 1 : index
    %c0_44 = arith.constant 0 : index
    %c0_45 = arith.constant 0 : index
    %130 = vector.load %arg5[%c1_43, %c0_44, %c0_45] : memref<3x64x8xf32, #tpu.memory_space<vmem>>, vector<1x64x8xf32>
    %131 = vector.shape_cast %130 : vector<1x64x8xf32> to vector<64x8xf32>
    %cst_46 = arith.constant dense<0.000000e+00> : vector<64x8xf32>
    %132 = tpu.matmul %129, %131, %cst_46 {dimension_numbers = #tpu.dot_dimension_numbers<[1], [0], [0], [1], [0, 0, 1, 1], [], []>} : vector<64x64xf32>, vector<64x8xf32>, vector<64x8xf32> -> vector<64x8xf32>
    %133 = math.tanh %132 : vector<64x8xf32>
    %c1_47 = arith.constant 1 : index
    %c0_48 = arith.constant 0 : index
    %c0_49 = arith.constant 0 : index
    %134 = vector.load %arg6[%c1_47, %c0_48, %c0_49] : memref<3x1x8xf32, #tpu.memory_space<vmem>>, vector<1x1x8xf32>
    %135 = vector.shape_cast %134 : vector<1x1x8xf32> to vector<1x8xf32>
    %136 = vector.broadcast %135 : vector<1x8xf32> to vector<64x8xf32>
    %137 = arith.mulf %133, %136 : vector<64x8xf32>
    %c1_50 = arith.constant 1 : index
    %c0_51 = arith.constant 0 : index
    %c0_52 = arith.constant 0 : index
    %138 = vector.load %arg7[%c1_50, %c0_51, %c0_52] : memref<3x64x8xf32, #tpu.memory_space<vmem>>, vector<1x64x8xf32>
    %139 = vector.shape_cast %138 : vector<1x64x8xf32> to vector<64x8xf32>
    %140 = arith.addf %137, %139 : vector<64x8xf32>
    %141 = vector.extract_strided_slice %140 {offsets = [0, 0], sizes = [16, 1], strides = [1, 1]} : vector<64x8xf32> to vector<16x1xf32>
    %142 = vector.broadcast %141 : vector<16x1xf32> to vector<16x64xf32>
    %143 = arith.mulf %142, %86 : vector<16x64xf32>
    %144 = vector.extract_strided_slice %140 {offsets = [16, 0], sizes = [16, 1], strides = [1, 1]} : vector<64x8xf32> to vector<16x1xf32>
    %145 = vector.broadcast %144 : vector<16x1xf32> to vector<16x64xf32>
    %146 = arith.mulf %145, %95 : vector<16x64xf32>
    %147 = arith.addf %143, %146 : vector<16x64xf32>
    %148 = vector.extract_strided_slice %140 {offsets = [32, 0], sizes = [16, 1], strides = [1, 1]} : vector<64x8xf32> to vector<16x1xf32>
    %149 = vector.broadcast %148 : vector<16x1xf32> to vector<16x64xf32>
    %150 = arith.mulf %149, %104 : vector<16x64xf32>
    %151 = arith.addf %147, %150 : vector<16x64xf32>
    %152 = vector.extract_strided_slice %140 {offsets = [48, 0], sizes = [16, 1], strides = [1, 1]} : vector<64x8xf32> to vector<16x1xf32>
    %153 = vector.broadcast %152 : vector<16x1xf32> to vector<16x64xf32>
    %154 = arith.mulf %153, %113 : vector<16x64xf32>
    %155 = arith.addf %151, %154 : vector<16x64xf32>
    %156 = vector.extract_strided_slice %140 {offsets = [0, 1], sizes = [16, 1], strides = [1, 1]} : vector<64x8xf32> to vector<16x1xf32>
    %157 = vector.broadcast %156 : vector<16x1xf32> to vector<16x64xf32>
    %158 = arith.mulf %157, %86 : vector<16x64xf32>
    %159 = vector.extract_strided_slice %140 {offsets = [16, 1], sizes = [16, 1], strides = [1, 1]} : vector<64x8xf32> to vector<16x1xf32>
    %160 = vector.broadcast %159 : vector<16x1xf32> to vector<16x64xf32>
    %161 = arith.mulf %160, %95 : vector<16x64xf32>
    %162 = arith.addf %158, %161 : vector<16x64xf32>
    %163 = vector.extract_strided_slice %140 {offsets = [32, 1], sizes = [16, 1], strides = [1, 1]} : vector<64x8xf32> to vector<16x1xf32>
    %164 = vector.broadcast %163 : vector<16x1xf32> to vector<16x64xf32>
    %165 = arith.mulf %164, %104 : vector<16x64xf32>
    %166 = arith.addf %162, %165 : vector<16x64xf32>
    %167 = vector.extract_strided_slice %140 {offsets = [48, 1], sizes = [16, 1], strides = [1, 1]} : vector<64x8xf32> to vector<16x1xf32>
    %168 = vector.broadcast %167 : vector<16x1xf32> to vector<16x64xf32>
    %169 = arith.mulf %168, %113 : vector<16x64xf32>
    %170 = arith.addf %166, %169 : vector<16x64xf32>
    %171 = vector.extract_strided_slice %140 {offsets = [0, 2], sizes = [16, 1], strides = [1, 1]} : vector<64x8xf32> to vector<16x1xf32>
    %172 = vector.broadcast %171 : vector<16x1xf32> to vector<16x64xf32>
    %173 = arith.mulf %172, %86 : vector<16x64xf32>
    %174 = vector.extract_strided_slice %140 {offsets = [16, 2], sizes = [16, 1], strides = [1, 1]} : vector<64x8xf32> to vector<16x1xf32>
    %175 = vector.broadcast %174 : vector<16x1xf32> to vector<16x64xf32>
    %176 = arith.mulf %175, %95 : vector<16x64xf32>
    %177 = arith.addf %173, %176 : vector<16x64xf32>
    %178 = vector.extract_strided_slice %140 {offsets = [32, 2], sizes = [16, 1], strides = [1, 1]} : vector<64x8xf32> to vector<16x1xf32>
    %179 = vector.broadcast %178 : vector<16x1xf32> to vector<16x64xf32>
    %180 = arith.mulf %179, %104 : vector<16x64xf32>
    %181 = arith.addf %177, %180 : vector<16x64xf32>
    %182 = vector.extract_strided_slice %140 {offsets = [48, 2], sizes = [16, 1], strides = [1, 1]} : vector<64x8xf32> to vector<16x1xf32>
    %183 = vector.broadcast %182 : vector<16x1xf32> to vector<16x64xf32>
    %184 = arith.mulf %183, %113 : vector<16x64xf32>
    %185 = arith.addf %181, %184 : vector<16x64xf32>
    %186 = vector.extract_strided_slice %140 {offsets = [0, 3], sizes = [16, 1], strides = [1, 1]} : vector<64x8xf32> to vector<16x1xf32>
    %187 = vector.broadcast %186 : vector<16x1xf32> to vector<16x64xf32>
    %188 = arith.mulf %187, %86 : vector<16x64xf32>
    %189 = vector.extract_strided_slice %140 {offsets = [16, 3], sizes = [16, 1], strides = [1, 1]} : vector<64x8xf32> to vector<16x1xf32>
    %190 = vector.broadcast %189 : vector<16x1xf32> to vector<16x64xf32>
    %191 = arith.mulf %190, %95 : vector<16x64xf32>
    %192 = arith.addf %188, %191 : vector<16x64xf32>
    %193 = vector.extract_strided_slice %140 {offsets = [32, 3], sizes = [16, 1], strides = [1, 1]} : vector<64x8xf32> to vector<16x1xf32>
    %194 = vector.broadcast %193 : vector<16x1xf32> to vector<16x64xf32>
    %195 = arith.mulf %194, %104 : vector<16x64xf32>
    %196 = arith.addf %192, %195 : vector<16x64xf32>
    %197 = vector.extract_strided_slice %140 {offsets = [48, 3], sizes = [16, 1], strides = [1, 1]} : vector<64x8xf32> to vector<16x1xf32>
    %198 = vector.broadcast %197 : vector<16x1xf32> to vector<16x64xf32>
    %199 = arith.mulf %198, %113 : vector<16x64xf32>
    %200 = arith.addf %196, %199 : vector<16x64xf32>
    %201 = vector.extract_strided_slice %140 {offsets = [0, 4], sizes = [16, 1], strides = [1, 1]} : vector<64x8xf32> to vector<16x1xf32>
    %202 = vector.broadcast %201 : vector<16x1xf32> to vector<16x64xf32>
    %203 = arith.mulf %202, %86 : vector<16x64xf32>
    %204 = vector.extract_strided_slice %140 {offsets = [16, 4], sizes = [16, 1], strides = [1, 1]} : vector<64x8xf32> to vector<16x1xf32>
    %205 = vector.broadcast %204 : vector<16x1xf32> to vector<16x64xf32>
    %206 = arith.mulf %205, %95 : vector<16x64xf32>
    %207 = arith.addf %203, %206 : vector<16x64xf32>
    %208 = vector.extract_strided_slice %140 {offsets = [32, 4], sizes = [16, 1], strides = [1, 1]} : vector<64x8xf32> to vector<16x1xf32>
    %209 = vector.broadcast %208 : vector<16x1xf32> to vector<16x64xf32>
    %210 = arith.mulf %209, %104 : vector<16x64xf32>
    %211 = arith.addf %207, %210 : vector<16x64xf32>
    %212 = vector.extract_strided_slice %140 {offsets = [48, 4], sizes = [16, 1], strides = [1, 1]} : vector<64x8xf32> to vector<16x1xf32>
    %213 = vector.broadcast %212 : vector<16x1xf32> to vector<16x64xf32>
    %214 = arith.mulf %213, %113 : vector<16x64xf32>
    %215 = arith.addf %211, %214 : vector<16x64xf32>
    %c1_53 = arith.constant 1 : index
    %c0_54 = arith.constant 0 : index
    %216 = vector.load %arg8[%c1_53, %c0_54] : memref<3x64xf32, #tpu.memory_space<vmem>>, vector<1x64xf32>
    %217 = vector.shape_cast %216 : vector<1x64xf32> to vector<64xf32>
    %218 = vector.shape_cast %217 : vector<64xf32> to vector<1x64xf32>
    %219 = arith.mulf %155, %155 : vector<16x64xf32>
    %cst_55 = arith.constant dense<0.000000e+00> : vector<16xf32>
    %220 = vector.multi_reduction <add>, %219, %cst_55 [1] : vector<16x64xf32> to vector<16xf32>
    %221 = vector.shape_cast %220 : vector<16xf32> to vector<16x1xf32>
    %cst_56 = arith.constant 6.400000e+01 : f32
    %222 = vector.broadcast %cst_56 : f32 to vector<16x1xf32>
    %223 = arith.divf %221, %222 : vector<16x1xf32>
    %cst_57 = arith.constant 1.1920929E-7 : f32
    %224 = vector.broadcast %cst_57 : f32 to vector<16x1xf32>
    %225 = arith.addf %223, %224 : vector<16x1xf32>
    %226 = math.rsqrt %225 : vector<16x1xf32>
    %227 = vector.broadcast %226 : vector<16x1xf32> to vector<16x64xf32>
    %228 = arith.mulf %155, %227 : vector<16x64xf32>
    %229 = vector.broadcast %218 : vector<1x64xf32> to vector<16x64xf32>
    %230 = arith.mulf %228, %229 : vector<16x64xf32>
    %c1_58 = arith.constant 1 : index
    %c0_59 = arith.constant 0 : index
    %c0_60 = arith.constant 0 : index
    %231 = vector.load %arg9[%c1_58, %c0_59, %c0_60] : memref<3x64x128xf32, #tpu.memory_space<vmem>>, vector<1x64x128xf32>
    %232 = vector.shape_cast %231 : vector<1x64x128xf32> to vector<64x128xf32>
    %cst_61 = arith.constant dense<0.000000e+00> : vector<16x128xf32>
    %233 = tpu.matmul %230, %232, %cst_61 {dimension_numbers = #tpu.dot_dimension_numbers<[1], [0], [0], [1], [0, 0, 1, 1], [], []>} : vector<16x64xf32>, vector<64x128xf32>, vector<16x128xf32> -> vector<16x128xf32>
    %c1_62 = arith.constant 1 : index
    %c0_63 = arith.constant 0 : index
    %234 = vector.load %arg10[%c1_62, %c0_63] : memref<3x128xf32, #tpu.memory_space<vmem>>, vector<1x128xf32>
    %235 = vector.shape_cast %234 : vector<1x128xf32> to vector<128xf32>
    %236 = vector.shape_cast %235 : vector<128xf32> to vector<1x128xf32>
    %237 = vector.broadcast %236 : vector<1x128xf32> to vector<16x128xf32>
    %238 = arith.addf %233, %237 : vector<16x128xf32>
    %cst_64 = arith.constant 0.000000e+00 : f32
    %239 = vector.broadcast %cst_64 : f32 to vector<16x128xf32>
    %240 = arith.maximumf %238, %239 : vector<16x128xf32>
    %241 = arith.mulf %240, %240 : vector<16x128xf32>
    %c1_65 = arith.constant 1 : index
    %c0_66 = arith.constant 0 : index
    %c0_67 = arith.constant 0 : index
    %242 = vector.load %arg11[%c1_65, %c0_66, %c0_67] : memref<3x128x64xf32, #tpu.memory_space<vmem>>, vector<1x128x64xf32>
    %243 = vector.shape_cast %242 : vector<1x128x64xf32> to vector<128x64xf32>
    %cst_68 = arith.constant dense<0.000000e+00> : vector<16x64xf32>
    %244 = tpu.matmul %241, %243, %cst_68 {dimension_numbers = #tpu.dot_dimension_numbers<[1], [0], [0], [1], [0, 0, 1, 1], [], []>} : vector<16x128xf32>, vector<128x64xf32>, vector<16x64xf32> -> vector<16x64xf32>
    %c1_69 = arith.constant 1 : index
    %c0_70 = arith.constant 0 : index
    %245 = vector.load %arg12[%c1_69, %c0_70] : memref<3x64xf32, #tpu.memory_space<vmem>>, vector<1x64xf32>
    %246 = vector.shape_cast %245 : vector<1x64xf32> to vector<64xf32>
    %247 = vector.shape_cast %246 : vector<64xf32> to vector<1x64xf32>
    %248 = vector.broadcast %247 : vector<1x64xf32> to vector<16x64xf32>
    %249 = arith.addf %244, %248 : vector<16x64xf32>
    %250 = vector.extract_strided_slice %140 {offsets = [0, 5], sizes = [16, 1], strides = [1, 1]} : vector<64x8xf32> to vector<16x1xf32>
    %251 = vector.broadcast %250 : vector<16x1xf32> to vector<16x64xf32>
    %252 = arith.mulf %251, %249 : vector<16x64xf32>
    %253 = arith.addf %170, %252 : vector<16x64xf32>
    %254 = vector.extract_strided_slice %140 {offsets = [16, 5], sizes = [16, 1], strides = [1, 1]} : vector<64x8xf32> to vector<16x1xf32>
    %255 = vector.broadcast %254 : vector<16x1xf32> to vector<16x64xf32>
    %256 = arith.mulf %255, %249 : vector<16x64xf32>
    %257 = arith.addf %185, %256 : vector<16x64xf32>
    %258 = vector.extract_strided_slice %140 {offsets = [32, 5], sizes = [16, 1], strides = [1, 1]} : vector<64x8xf32> to vector<16x1xf32>
    %259 = vector.broadcast %258 : vector<16x1xf32> to vector<16x64xf32>
    %260 = arith.mulf %259, %249 : vector<16x64xf32>
    %261 = arith.addf %200, %260 : vector<16x64xf32>
    %262 = vector.extract_strided_slice %140 {offsets = [48, 5], sizes = [16, 1], strides = [1, 1]} : vector<64x8xf32> to vector<16x1xf32>
    %263 = vector.broadcast %262 : vector<16x1xf32> to vector<16x64xf32>
    %264 = arith.mulf %263, %249 : vector<16x64xf32>
    %265 = arith.addf %215, %264 : vector<16x64xf32>
    %266 = tpu.concatenate %253, %257, %261, %265 in 0 : vector<16x64xf32>, vector<16x64xf32>, vector<16x64xf32>, vector<16x64xf32> -> vector<64x64xf32>
    %c2 = arith.constant 2 : index
    %c0_71 = arith.constant 0 : index
    %267 = vector.load %arg4[%c2, %c0_71] : memref<3x64xf32, #tpu.memory_space<vmem>>, vector<1x64xf32>
    %268 = vector.shape_cast %267 : vector<1x64xf32> to vector<64xf32>
    %269 = vector.shape_cast %268 : vector<64xf32> to vector<1x64xf32>
    %270 = arith.mulf %266, %266 : vector<64x64xf32>
    %cst_72 = arith.constant dense<0.000000e+00> : vector<64xf32>
    %271 = vector.multi_reduction <add>, %270, %cst_72 [1] : vector<64x64xf32> to vector<64xf32>
    %272 = vector.shape_cast %271 : vector<64xf32> to vector<64x1xf32>
    %cst_73 = arith.constant 6.400000e+01 : f32
    %273 = vector.broadcast %cst_73 : f32 to vector<64x1xf32>
    %274 = arith.divf %272, %273 : vector<64x1xf32>
    %cst_74 = arith.constant 1.1920929E-7 : f32
    %275 = vector.broadcast %cst_74 : f32 to vector<64x1xf32>
    %276 = arith.addf %274, %275 : vector<64x1xf32>
    %277 = math.rsqrt %276 : vector<64x1xf32>
    %278 = vector.broadcast %277 : vector<64x1xf32> to vector<64x64xf32>
    %279 = arith.mulf %266, %278 : vector<64x64xf32>
    %280 = vector.broadcast %269 : vector<1x64xf32> to vector<64x64xf32>
    %281 = arith.mulf %279, %280 : vector<64x64xf32>
    %c2_75 = arith.constant 2 : index
    %c0_76 = arith.constant 0 : index
    %c0_77 = arith.constant 0 : index
    %282 = vector.load %arg5[%c2_75, %c0_76, %c0_77] : memref<3x64x8xf32, #tpu.memory_space<vmem>>, vector<1x64x8xf32>
    %283 = vector.shape_cast %282 : vector<1x64x8xf32> to vector<64x8xf32>
    %cst_78 = arith.constant dense<0.000000e+00> : vector<64x8xf32>
    %284 = tpu.matmul %281, %283, %cst_78 {dimension_numbers = #tpu.dot_dimension_numbers<[1], [0], [0], [1], [0, 0, 1, 1], [], []>} : vector<64x64xf32>, vector<64x8xf32>, vector<64x8xf32> -> vector<64x8xf32>
    %285 = math.tanh %284 : vector<64x8xf32>
    %c2_79 = arith.constant 2 : index
    %c0_80 = arith.constant 0 : index
    %c0_81 = arith.constant 0 : index
    %286 = vector.load %arg6[%c2_79, %c0_80, %c0_81] : memref<3x1x8xf32, #tpu.memory_space<vmem>>, vector<1x1x8xf32>
    %287 = vector.shape_cast %286 : vector<1x1x8xf32> to vector<1x8xf32>
    %288 = vector.broadcast %287 : vector<1x8xf32> to vector<64x8xf32>
    %289 = arith.mulf %285, %288 : vector<64x8xf32>
    %c2_82 = arith.constant 2 : index
    %c0_83 = arith.constant 0 : index
    %c0_84 = arith.constant 0 : index
    %290 = vector.load %arg7[%c2_82, %c0_83, %c0_84] : memref<3x64x8xf32, #tpu.memory_space<vmem>>, vector<1x64x8xf32>
    %291 = vector.shape_cast %290 : vector<1x64x8xf32> to vector<64x8xf32>
    %292 = arith.addf %289, %291 : vector<64x8xf32>
    %293 = vector.extract_strided_slice %292 {offsets = [0, 0], sizes = [16, 1], strides = [1, 1]} : vector<64x8xf32> to vector<16x1xf32>
    %294 = vector.broadcast %293 : vector<16x1xf32> to vector<16x64xf32>
    %295 = arith.mulf %294, %253 : vector<16x64xf32>
    %296 = vector.extract_strided_slice %292 {offsets = [16, 0], sizes = [16, 1], strides = [1, 1]} : vector<64x8xf32> to vector<16x1xf32>
    %297 = vector.broadcast %296 : vector<16x1xf32> to vector<16x64xf32>
    %298 = arith.mulf %297, %257 : vector<16x64xf32>
    %299 = arith.addf %295, %298 : vector<16x64xf32>
    %300 = vector.extract_strided_slice %292 {offsets = [32, 0], sizes = [16, 1], strides = [1, 1]} : vector<64x8xf32> to vector<16x1xf32>
    %301 = vector.broadcast %300 : vector<16x1xf32> to vector<16x64xf32>
    %302 = arith.mulf %301, %261 : vector<16x64xf32>
    %303 = arith.addf %299, %302 : vector<16x64xf32>
    %304 = vector.extract_strided_slice %292 {offsets = [48, 0], sizes = [16, 1], strides = [1, 1]} : vector<64x8xf32> to vector<16x1xf32>
    %305 = vector.broadcast %304 : vector<16x1xf32> to vector<16x64xf32>
    %306 = arith.mulf %305, %265 : vector<16x64xf32>
    %307 = arith.addf %303, %306 : vector<16x64xf32>
    %308 = vector.extract_strided_slice %292 {offsets = [0, 1], sizes = [16, 1], strides = [1, 1]} : vector<64x8xf32> to vector<16x1xf32>
    %309 = vector.broadcast %308 : vector<16x1xf32> to vector<16x64xf32>
    %310 = arith.mulf %309, %253 : vector<16x64xf32>
    %311 = vector.extract_strided_slice %292 {offsets = [16, 1], sizes = [16, 1], strides = [1, 1]} : vector<64x8xf32> to vector<16x1xf32>
    %312 = vector.broadcast %311 : vector<16x1xf32> to vector<16x64xf32>
    %313 = arith.mulf %312, %257 : vector<16x64xf32>
    %314 = arith.addf %310, %313 : vector<16x64xf32>
    %315 = vector.extract_strided_slice %292 {offsets = [32, 1], sizes = [16, 1], strides = [1, 1]} : vector<64x8xf32> to vector<16x1xf32>
    %316 = vector.broadcast %315 : vector<16x1xf32> to vector<16x64xf32>
    %317 = arith.mulf %316, %261 : vector<16x64xf32>
    %318 = arith.addf %314, %317 : vector<16x64xf32>
    %319 = vector.extract_strided_slice %292 {offsets = [48, 1], sizes = [16, 1], strides = [1, 1]} : vector<64x8xf32> to vector<16x1xf32>
    %320 = vector.broadcast %319 : vector<16x1xf32> to vector<16x64xf32>
    %321 = arith.mulf %320, %265 : vector<16x64xf32>
    %322 = arith.addf %318, %321 : vector<16x64xf32>
    %323 = vector.extract_strided_slice %292 {offsets = [0, 2], sizes = [16, 1], strides = [1, 1]} : vector<64x8xf32> to vector<16x1xf32>
    %324 = vector.broadcast %323 : vector<16x1xf32> to vector<16x64xf32>
    %325 = arith.mulf %324, %253 : vector<16x64xf32>
    %326 = vector.extract_strided_slice %292 {offsets = [16, 2], sizes = [16, 1], strides = [1, 1]} : vector<64x8xf32> to vector<16x1xf32>
    %327 = vector.broadcast %326 : vector<16x1xf32> to vector<16x64xf32>
    %328 = arith.mulf %327, %257 : vector<16x64xf32>
    %329 = arith.addf %325, %328 : vector<16x64xf32>
    %330 = vector.extract_strided_slice %292 {offsets = [32, 2], sizes = [16, 1], strides = [1, 1]} : vector<64x8xf32> to vector<16x1xf32>
    %331 = vector.broadcast %330 : vector<16x1xf32> to vector<16x64xf32>
    %332 = arith.mulf %331, %261 : vector<16x64xf32>
    %333 = arith.addf %329, %332 : vector<16x64xf32>
    %334 = vector.extract_strided_slice %292 {offsets = [48, 2], sizes = [16, 1], strides = [1, 1]} : vector<64x8xf32> to vector<16x1xf32>
    %335 = vector.broadcast %334 : vector<16x1xf32> to vector<16x64xf32>
    %336 = arith.mulf %335, %265 : vector<16x64xf32>
    %337 = arith.addf %333, %336 : vector<16x64xf32>
    %338 = vector.extract_strided_slice %292 {offsets = [0, 3], sizes = [16, 1], strides = [1, 1]} : vector<64x8xf32> to vector<16x1xf32>
    %339 = vector.broadcast %338 : vector<16x1xf32> to vector<16x64xf32>
    %340 = arith.mulf %339, %253 : vector<16x64xf32>
    %341 = vector.extract_strided_slice %292 {offsets = [16, 3], sizes = [16, 1], strides = [1, 1]} : vector<64x8xf32> to vector<16x1xf32>
    %342 = vector.broadcast %341 : vector<16x1xf32> to vector<16x64xf32>
    %343 = arith.mulf %342, %257 : vector<16x64xf32>
    %344 = arith.addf %340, %343 : vector<16x64xf32>
    %345 = vector.extract_strided_slice %292 {offsets = [32, 3], sizes = [16, 1], strides = [1, 1]} : vector<64x8xf32> to vector<16x1xf32>
    %346 = vector.broadcast %345 : vector<16x1xf32> to vector<16x64xf32>
    %347 = arith.mulf %346, %261 : vector<16x64xf32>
    %348 = arith.addf %344, %347 : vector<16x64xf32>
    %349 = vector.extract_strided_slice %292 {offsets = [48, 3], sizes = [16, 1], strides = [1, 1]} : vector<64x8xf32> to vector<16x1xf32>
    %350 = vector.broadcast %349 : vector<16x1xf32> to vector<16x64xf32>
    %351 = arith.mulf %350, %265 : vector<16x64xf32>
    %352 = arith.addf %348, %351 : vector<16x64xf32>
    %353 = vector.extract_strided_slice %292 {offsets = [0, 4], sizes = [16, 1], strides = [1, 1]} : vector<64x8xf32> to vector<16x1xf32>
    %354 = vector.broadcast %353 : vector<16x1xf32> to vector<16x64xf32>
    %355 = arith.mulf %354, %253 : vector<16x64xf32>
    %356 = vector.extract_strided_slice %292 {offsets = [16, 4], sizes = [16, 1], strides = [1, 1]} : vector<64x8xf32> to vector<16x1xf32>
    %357 = vector.broadcast %356 : vector<16x1xf32> to vector<16x64xf32>
    %358 = arith.mulf %357, %257 : vector<16x64xf32>
    %359 = arith.addf %355, %358 : vector<16x64xf32>
    %360 = vector.extract_strided_slice %292 {offsets = [32, 4], sizes = [16, 1], strides = [1, 1]} : vector<64x8xf32> to vector<16x1xf32>
    %361 = vector.broadcast %360 : vector<16x1xf32> to vector<16x64xf32>
    %362 = arith.mulf %361, %261 : vector<16x64xf32>
    %363 = arith.addf %359, %362 : vector<16x64xf32>
    %364 = vector.extract_strided_slice %292 {offsets = [48, 4], sizes = [16, 1], strides = [1, 1]} : vector<64x8xf32> to vector<16x1xf32>
    %365 = vector.broadcast %364 : vector<16x1xf32> to vector<16x64xf32>
    %366 = arith.mulf %365, %265 : vector<16x64xf32>
    %367 = arith.addf %363, %366 : vector<16x64xf32>
    %c2_85 = arith.constant 2 : index
    %c0_86 = arith.constant 0 : index
    %368 = vector.load %arg8[%c2_85, %c0_86] : memref<3x64xf32, #tpu.memory_space<vmem>>, vector<1x64xf32>
    %369 = vector.shape_cast %368 : vector<1x64xf32> to vector<64xf32>
    %370 = vector.shape_cast %369 : vector<64xf32> to vector<1x64xf32>
    %371 = arith.mulf %307, %307 : vector<16x64xf32>
    %cst_87 = arith.constant dense<0.000000e+00> : vector<16xf32>
    %372 = vector.multi_reduction <add>, %371, %cst_87 [1] : vector<16x64xf32> to vector<16xf32>
    %373 = vector.shape_cast %372 : vector<16xf32> to vector<16x1xf32>
    %cst_88 = arith.constant 6.400000e+01 : f32
    %374 = vector.broadcast %cst_88 : f32 to vector<16x1xf32>
    %375 = arith.divf %373, %374 : vector<16x1xf32>
    %cst_89 = arith.constant 1.1920929E-7 : f32
    %376 = vector.broadcast %cst_89 : f32 to vector<16x1xf32>
    %377 = arith.addf %375, %376 : vector<16x1xf32>
    %378 = math.rsqrt %377 : vector<16x1xf32>
    %379 = vector.broadcast %378 : vector<16x1xf32> to vector<16x64xf32>
    %380 = arith.mulf %307, %379 : vector<16x64xf32>
    %381 = vector.broadcast %370 : vector<1x64xf32> to vector<16x64xf32>
    %382 = arith.mulf %380, %381 : vector<16x64xf32>
    %c2_90 = arith.constant 2 : index
    %c0_91 = arith.constant 0 : index
    %c0_92 = arith.constant 0 : index
    %383 = vector.load %arg9[%c2_90, %c0_91, %c0_92] : memref<3x64x128xf32, #tpu.memory_space<vmem>>, vector<1x64x128xf32>
    %384 = vector.shape_cast %383 : vector<1x64x128xf32> to vector<64x128xf32>
    %cst_93 = arith.constant dense<0.000000e+00> : vector<16x128xf32>
    %385 = tpu.matmul %382, %384, %cst_93 {dimension_numbers = #tpu.dot_dimension_numbers<[1], [0], [0], [1], [0, 0, 1, 1], [], []>} : vector<16x64xf32>, vector<64x128xf32>, vector<16x128xf32> -> vector<16x128xf32>
    %c2_94 = arith.constant 2 : index
    %c0_95 = arith.constant 0 : index
    %386 = vector.load %arg10[%c2_94, %c0_95] : memref<3x128xf32, #tpu.memory_space<vmem>>, vector<1x128xf32>
    %387 = vector.shape_cast %386 : vector<1x128xf32> to vector<128xf32>
    %388 = vector.shape_cast %387 : vector<128xf32> to vector<1x128xf32>
    %389 = vector.broadcast %388 : vector<1x128xf32> to vector<16x128xf32>
    %390 = arith.addf %385, %389 : vector<16x128xf32>
    %cst_96 = arith.constant 0.000000e+00 : f32
    %391 = vector.broadcast %cst_96 : f32 to vector<16x128xf32>
    %392 = arith.maximumf %390, %391 : vector<16x128xf32>
    %393 = arith.mulf %392, %392 : vector<16x128xf32>
    %c2_97 = arith.constant 2 : index
    %c0_98 = arith.constant 0 : index
    %c0_99 = arith.constant 0 : index
    %394 = vector.load %arg11[%c2_97, %c0_98, %c0_99] : memref<3x128x64xf32, #tpu.memory_space<vmem>>, vector<1x128x64xf32>
    %395 = vector.shape_cast %394 : vector<1x128x64xf32> to vector<128x64xf32>
    %cst_100 = arith.constant dense<0.000000e+00> : vector<16x64xf32>
    %396 = tpu.matmul %393, %395, %cst_100 {dimension_numbers = #tpu.dot_dimension_numbers<[1], [0], [0], [1], [0, 0, 1, 1], [], []>} : vector<16x128xf32>, vector<128x64xf32>, vector<16x64xf32> -> vector<16x64xf32>
    %c2_101 = arith.constant 2 : index
    %c0_102 = arith.constant 0 : index
    %397 = vector.load %arg12[%c2_101, %c0_102] : memref<3x64xf32, #tpu.memory_space<vmem>>, vector<1x64xf32>
    %398 = vector.shape_cast %397 : vector<1x64xf32> to vector<64xf32>
    %399 = vector.shape_cast %398 : vector<64xf32> to vector<1x64xf32>
    %400 = vector.broadcast %399 : vector<1x64xf32> to vector<16x64xf32>
    %401 = arith.addf %396, %400 : vector<16x64xf32>
    %402 = vector.extract_strided_slice %292 {offsets = [0, 5], sizes = [16, 1], strides = [1, 1]} : vector<64x8xf32> to vector<16x1xf32>
    %403 = vector.broadcast %402 : vector<16x1xf32> to vector<16x64xf32>
    %404 = arith.mulf %403, %401 : vector<16x64xf32>
    %405 = arith.addf %322, %404 : vector<16x64xf32>
    %406 = vector.extract_strided_slice %292 {offsets = [16, 5], sizes = [16, 1], strides = [1, 1]} : vector<64x8xf32> to vector<16x1xf32>
    %407 = vector.broadcast %406 : vector<16x1xf32> to vector<16x64xf32>
    %408 = arith.mulf %407, %401 : vector<16x64xf32>
    %409 = arith.addf %337, %408 : vector<16x64xf32>
    %410 = vector.extract_strided_slice %292 {offsets = [32, 5], sizes = [16, 1], strides = [1, 1]} : vector<64x8xf32> to vector<16x1xf32>
    %411 = vector.broadcast %410 : vector<16x1xf32> to vector<16x64xf32>
    %412 = arith.mulf %411, %401 : vector<16x64xf32>
    %413 = arith.addf %352, %412 : vector<16x64xf32>
    %414 = vector.extract_strided_slice %292 {offsets = [48, 5], sizes = [16, 1], strides = [1, 1]} : vector<64x8xf32> to vector<16x1xf32>
    %415 = vector.broadcast %414 : vector<16x1xf32> to vector<16x64xf32>
    %416 = arith.mulf %415, %401 : vector<16x64xf32>
    %417 = arith.addf %367, %416 : vector<16x64xf32>
    %418 = arith.addf %405, %409 : vector<16x64xf32>
    %419 = arith.addf %418, %413 : vector<16x64xf32>
    %420 = arith.addf %419, %417 : vector<16x64xf32>
    %c0_103 = arith.constant 0 : index
    %c0_104 = arith.constant 0 : index
    %421 = vector.load %arg13[%c0_103, %c0_104] : memref<1x64xf32, #tpu.memory_space<vmem>>, vector<1x64xf32>
    %422 = arith.mulf %420, %420 : vector<16x64xf32>
    %cst_105 = arith.constant dense<0.000000e+00> : vector<16xf32>
    %423 = vector.multi_reduction <add>, %422, %cst_105 [1] : vector<16x64xf32> to vector<16xf32>
    %424 = vector.shape_cast %423 : vector<16xf32> to vector<16x1xf32>
    %cst_106 = arith.constant 6.400000e+01 : f32
    %425 = vector.broadcast %cst_106 : f32 to vector<16x1xf32>
    %426 = arith.divf %424, %425 : vector<16x1xf32>
    %cst_107 = arith.constant 1.1920929E-7 : f32
    %427 = vector.broadcast %cst_107 : f32 to vector<16x1xf32>
    %428 = arith.addf %426, %427 : vector<16x1xf32>
    %429 = math.rsqrt %428 : vector<16x1xf32>
    %430 = vector.broadcast %429 : vector<16x1xf32> to vector<16x64xf32>
    %431 = arith.mulf %420, %430 : vector<16x64xf32>
    %432 = vector.broadcast %421 : vector<1x64xf32> to vector<16x64xf32>
    %433 = arith.mulf %431, %432 : vector<16x64xf32>
    %c0_108 = arith.constant 0 : index
    %c0_109 = arith.constant 0 : index
    %434 = vector.load %arg14[%c0_108, %c0_109] : memref<16x64xf32, #tpu.memory_space<vmem>>, vector<16x64xf32>
    tpu.vector_store %arg14[%c0_108, %c0_109], %433 {strides = array<i32>} : memref<16x64xf32, #tpu.memory_space<vmem>>, vector<16x64xf32>,
    return
  }
  func.func @transform_0(%arg0: i32) -> (i32, i32) {
    %c0_i32 = arith.constant 0 : i32
    %c0_i32_0 = arith.constant 0 : i32
    return %arg0, %c0_i32 : i32, i32
  }
  func.func @transform_1(%arg0: i32) -> (i32, i32) {
    %c0_i32 = arith.constant 0 : i32
    %c0_i32_0 = arith.constant 0 : i32
    %c0_i32_1 = arith.constant 0 : i32
    return %c0_i32, %c0_i32_0 : i32, i32
  }
  func.func @transform_2(%arg0: i32) -> (i32, i32) {
    %c0_i32 = arith.constant 0 : i32
    %c0_i32_0 = arith.constant 0 : i32
    %c0_i32_1 = arith.constant 0 : i32
    return %c0_i32, %c0_i32_0 : i32, i32
  }
  func.func @transform_3(%arg0: i32) -> (i32, i32) {
    %c0_i32 = arith.constant 0 : i32
    %c0_i32_0 = arith.constant 0 : i32
    %c0_i32_1 = arith.constant 0 : i32
    return %c0_i32, %c0_i32_0 : i32, i32
  }
  func.func @transform_4(%arg0: i32) -> (i32, i32, i32) {
    %c0_i32 = arith.constant 0 : i32
    %c0_i32_0 = arith.constant 0 : i32
    %c0_i32_1 = arith.constant 0 : i32
    %c0_i32_2 = arith.constant 0 : i32
    return %c0_i32, %c0_i32_0, %c0_i32_1 : i32, i32, i32
  }
  func.func @transform_5(%arg0: i32) -> (i32, i32, i32) {
    %c0_i32 = arith.constant 0 : i32
    %c0_i32_0 = arith.constant 0 : i32
    %c0_i32_1 = arith.constant 0 : i32
    %c0_i32_2 = arith.constant 0 : i32
    return %c0_i32, %c0_i32_0, %c0_i32_1 : i32, i32, i32
  }
  func.func @transform_6(%arg0: i32) -> (i32, i32, i32) {
    %c0_i32 = arith.constant 0 : i32
    %c0_i32_0 = arith.constant 0 : i32
    %c0_i32_1 = arith.constant 0 : i32
    %c0_i32_2 = arith.constant 0 : i32
    return %c0_i32, %c0_i32_0, %c0_i32_1 : i32, i32, i32
  }
  func.func @transform_7(%arg0: i32) -> (i32, i32) {
    %c0_i32 = arith.constant 0 : i32
    %c0_i32_0 = arith.constant 0 : i32
    %c0_i32_1 = arith.constant 0 : i32
    return %c0_i32, %c0_i32_0 : i32, i32
  }
  func.func @transform_8(%arg0: i32) -> (i32, i32, i32) {
    %c0_i32 = arith.constant 0 : i32
    %c0_i32_0 = arith.constant 0 : i32
    %c0_i32_1 = arith.constant 0 : i32
    %c0_i32_2 = arith.constant 0 : i32
    return %c0_i32, %c0_i32_0, %c0_i32_1 : i32, i32, i32
  }
  func.func @transform_9(%arg0: i32) -> (i32, i32) {
    %c0_i32 = arith.constant 0 : i32
    %c0_i32_0 = arith.constant 0 : i32
    %c0_i32_1 = arith.constant 0 : i32
    return %c0_i32, %c0_i32_0 : i32, i32
  }
  func.func @transform_10(%arg0: i32) -> (i32, i32, i32) {
    %c0_i32 = arith.constant 0 : i32
    %c0_i32_0 = arith.constant 0 : i32
    %c0_i32_1 = arith.constant 0 : i32
    %c0_i32_2 = arith.constant 0 : i32
    return %c0_i32, %c0_i32_0, %c0_i32_1 : i32, i32, i32
  }
  func.func @transform_11(%arg0: i32) -> (i32, i32) {
    %c0_i32 = arith.constant 0 : i32
    %c0_i32_0 = arith.constant 0 : i32
    %c0_i32_1 = arith.constant 0 : i32
    return %c0_i32, %c0_i32_0 : i32, i32
  }
  func.func @transform_12(%arg0: i32) -> (i32, i32) {
    %c0_i32 = arith.constant 0 : i32
    %c0_i32_0 = arith.constant 0 : i32
    %c0_i32_1 = arith.constant 0 : i32
    return %c0_i32, %c0_i32_0 : i32, i32
  }
  func.func @transform_13(%arg0: i32) -> (i32, i32) {
    %c0_i32 = arith.constant 0 : i32
    %c0_i32_0 = arith.constant 0 : i32
    return %arg0, %c0_i32 : i32, i32
  }
}

</mosaic_0001>

<llo_original>
// kernel: simba_forward.1
$region0: #{simba_forward.1}
  #allocation0 [shape = 'u32[]', space=smem, size = 0x4, offset = 0x4, fixed_abs, tag = 'smem constant byte address 0x4 - core index']
  #allocation1 [shape = 'u32[72,128]{1,0:T(1,128)}', space=vmem, size = 0x9000, scoped, tag = 'internal scratch']
  %s0 = inlined_call_operand.vmem [shape: f32[16,32], index: 0, kind: input, shape index: {}]
  %s1 = inlined_call_operand.vmem [shape: f32[32,64], index: 1, kind: input, shape index: {}]
  %s2 = inlined_call_operand.vmem [shape: f32[1,64], index: 2, kind: input, shape index: {}]
  %s3 = inlined_call_operand.vmem [shape: f32[3,64], index: 3, kind: input, shape index: {}]
  %s4 = inlined_call_operand.vmem [shape: f32[3,64,8], index: 4, kind: input, shape index: {}]
  %s5 = inlined_call_operand.vmem [shape: f32[3,1,8], index: 5, kind: input, shape index: {}]
  %s6 = inlined_call_operand.vmem [shape: f32[3,64,8], index: 6, kind: input, shape index: {}]
  %s7 = inlined_call_operand.vmem [shape: f32[3,64], index: 7, kind: input, shape index: {}]
  %s8 = inlined_call_operand.vmem [shape: f32[3,64,128], index: 8, kind: input, shape index: {}]
  %s9 = inlined_call_operand.vmem [shape: f32[3,128], index: 9, kind: input, shape index: {}]
  %s10 = inlined_call_operand.vmem [shape: f32[3,128,64], index: 10, kind: input, shape index: {}]
  %s11 = inlined_call_operand.vmem [shape: f32[3,64], index: 11, kind: input, shape index: {}]
  %s12 = inlined_call_operand.vmem [shape: f32[1,64], index: 12, kind: input, shape index: {}]
  %s13 = inlined_call_operand.hbm [shape: f32[16,64], index: 13, kind: output, shape index: {}]
  %s14 = sld [smem:[#allocation0]]
  $region62: #{simba_forward.1} parent=0
    _
  %s16 = ssub.s32 1, %s14
  %s17 = scalar_select 0, %s16, %s14
  $region1: #{simba_forward.1} parent=0
    #allocation2 [shape = 'u8[8192]{0}', space=vmem, size = 0x2000, scoped, tag = 'output window, operand 0, single buffered']
    #allocation3 [shape = 's32[1]{0}', space=sflag, size = 0x4, scoped, tag = 'scoped memory for simba_forward.1']
    %18 = vsyncpa [#allocation3], 0
    // Predicated region
    $region2: #{simba_forward.1} parent=1 // pred_check
      _
    $region3: #{simba_forward.1} parent=1 // pred_check_branch
      %20 = sbr.rel (0) target = $region5
    $region4: #{simba_forward.1} parent=1 // pred_region
      _
    $region5: #{simba_forward.1} parent=1 // pred_fallthru
      _
    // Predicated region
    $region6: #{simba_forward.1} parent=1 // pred_check
      _
    $region7: #{simba_forward.1} parent=1 // pred_check_branch
      %22 = sbr.rel (0) target = $region9
    $region8: #{simba_forward.1} parent=1 // pred_region
      _
    $region9: #{simba_forward.1} parent=1 // pred_fallthru
      _
    // Predicated region
    $region10: #{simba_forward.1} parent=1 // pred_check
      _
    $region11: #{simba_forward.1} parent=1 // pred_check_branch
      %24 = sbr.rel (0) target = $region13
    $region12: #{simba_forward.1} parent=1 // pred_region
      _
    $region13: #{simba_forward.1} parent=1 // pred_fallthru
      _
    // Predicated region
    $region14: #{simba_forward.1} parent=1 // pred_check
      _
    $region15: #{simba_forward.1} parent=1 // pred_check_branch
      %26 = sbr.rel (0) target = $region17
    $region16: #{simba_forward.1} parent=1 // pred_region
      _
    $region17: #{simba_forward.1} parent=1 // pred_fallthru
      _
    // Predicated region
    $region18: #{simba_forward.1} parent=1 // pred_check
      _
    $region19: #{simba_forward.1} parent=1 // pred_check_branch
      %28 = sbr.rel (0) target = $region21
    $region20: #{simba_forward.1} parent=1 // pred_region
      _
    $region21: #{simba_forward.1} parent=1 // pred_fallthru
      _
    // Predicated region
    $region22: #{simba_forward.1} parent=1 // pred_check
      _
    $region23: #{simba_forward.1} parent=1 // pred_check_branch
      %30 = sbr.rel (0) target = $region25
    $region24: #{simba_forward.1} parent=1 // pred_region
      _
    $region25: #{simba_forward.1} parent=1 // pred_fallthru
      _
    // Predicated region
    $region26: #{simba_forward.1} parent=1 // pred_check
      _
    $region27: #{simba_forward.1} parent=1 // pred_check_branch
      %32 = sbr.rel (0) target = $region29
    $region28: #{simba_forward.1} parent=1 // pred_region
      _
    $region29: #{simba_forward.1} parent=1 // pred_fallthru
      _
    // Predicated region
    $region30: #{simba_forward.1} parent=1 // pred_check
      _
    $region31: #{simba_forward.1} parent=1 // pred_check_branch
      %34 = sbr.rel (0) target = $region33
    $region32: #{simba_forward.1} parent=1 // pred_region
      _
    $region33: #{simba_forward.1} parent=1 // pred_fallthru
      _
    // Predicated region
    $region34: #{simba_forward.1} parent=1 // pred_check
      _
    $region35: #{simba_forward.1} parent=1 // pred_check_branch
      %36 = sbr.rel (0) target = $region37
    $region36: #{simba_forward.1} parent=1 // pred_region
      _
    $region37: #{simba_forward.1} parent=1 // pred_fallthru
      _
    // Predicated region
    $region38: #{simba_forward.1} parent=1 // pred_check
      _
    $region39: #{simba_forward.1} parent=1 // pred_check_branch
      %38 = sbr.rel (0) target = $region41
    $region40: #{simba_forward.1} parent=1 // pred_region
      _
    $region41: #{simba_forward.1} parent=1 // pred_fallthru
      _
    // Predicated region
    $region42: #{simba_forward.1} parent=1 // pred_check
      _
    $region43: #{simba_forward.1} parent=1 // pred_check_branch
      %40 = sbr.rel (0) target = $region45
    $region44: #{simba_forward.1} parent=1 // pred_region
      _
    $region45: #{simba_forward.1} parent=1 // pred_fallthru
      _
    // Predicated region
    $region46: #{simba_forward.1} parent=1 // pred_check
      _
    $region47: #{simba_forward.1} parent=1 // pred_check_branch
      %42 = sbr.rel (0) target = $region49
    $region48: #{simba_forward.1} parent=1 // pred_region
      _
    $region49: #{simba_forward.1} parent=1 // pred_fallthru
      _
    // Predicated region
    $region50: #{simba_forward.1} parent=1 // pred_check
      _
    $region51: #{simba_forward.1} parent=1 // pred_check_branch
      %44 = sbr.rel (0) target = $region53
    $region52: #{simba_forward.1} parent=1 // pred_region
      _
    $region53: #{simba_forward.1} parent=1 // pred_fallthru
      _
    %v45 = vld [vmem:[%s0] sm:$0xff]
    %v46 = vld [vmem:[%s0 + $0x8] sm:$0xff]
    %v47 = vld [vmem:[%s1] sm:$0xff]
    %v48 = vld [vmem:[%s1 + $0x8] sm:$0xff]
    %v49 = vld [vmem:[%s1 + $0x10] sm:$0xff]
    %v50 = vld [vmem:[%s1 + $0x18] sm:$0xff]
    %v51 = vld [vmem:[%s2] sm:$0x1]
    %v53 = vperm.slane %v51, 0
    %vm55 = vcmask 261120
    %v57 = vsel %vm55, %v45, 0
    %v60 = vsel %vm55, %v46, 0
    %62 = vmatpush.msra.mxu0 0.0
    %63 = vmatpush.msra.mxu0 0.0
    %64 = vmatpush.msra.mxu0 0.0
    %65 = vmatpush.msra.mxu0 0.0
    %66 = vmatpush.msra.mxu0 0.0
    %67 = vmatpush.msra.mxu0 0.0
    %68 = vmatpush.msra.mxu0 0.0
    %69 = vmatpush.msra.mxu0 0.0
    %70 = vmatpush.msra.mxu0 0.0
    %71 = vmatpush.msra.mxu0 0.0
    %72 = vmatpush.msra.mxu0 0.0
    %73 = vmatpush.msra.mxu0 0.0
    %74 = vmatpush.msra.mxu0 %v50
    %75 = vmatpush.msra.mxu0 %v49
    %76 = vmatpush.msra.mxu0 %v48
    %77 = vmatpush.msra.mxu0 %v47
    %78 = vmatmul.f32.gmra.mxu0 %v57
    %v79 = vpop.f32.mrf.mxu0
    %v80 = vadd.f32 %v53, %v79
    %81 = vmatmul.f32.gmra.mxu0 %v60
    %v82 = vpop.f32.mrf.mxu0
    %v83 = vadd.f32 %v53, %v82
    %84 = vdwg.mxu0
    %v85 = vld [vmem:[%s3] sm:$0x1]
    %v86 = vmul.f32 %v80, %v80
    %v87 = vmul.f32 %v83, %v83
    %vm88 = vcmask 523264
    %v89 = vsel %vm88, %v86, 0.0
    %90 = vadd.xlane.f32.xlu0 %v89
    %v91 = vpop.xlane.xlu0 %90
    %v92 = vsel %vm88, %v87, 0.0
    %93 = vadd.xlane.f32.xlu0 %v92
    %v94 = vpop.xlane.xlu0 %93
    %v95 = vrcp.pop 64.0
    %v96 = vmul.f32 64.0, %v95
    %v97 = vsub.f32 1.0, %v96
    %v98 = vmul.f32 %v95, %v97
    %v99 = vadd.f32 %v95, %v98
    %vm100 = vweird.f32 %v95
    %v101 = vsel %vm100, %v95, %v99
    %v102 = vmul.f32 %v91, %v101
    %v103 = vmul.f32 %v94, %v101
    %v104 = vadd.f32 %v102, 1.1920929e-07
    %v105 = vadd.f32 %v103, 1.1920929e-07
    %v106 = vrsqrt.pop %v104
    %v107 = vmul.f32 %v106, %v104
    %v108 = vmul.f32 %v107, %v106
    %v109 = vmul.f32 0.5, %v108
    %v110 = vsub.f32 1.5, %v109
    %v111 = vmul.f32 %v106, %v110
    %vm112 = vweird.f32 %v104
    %vm113 = vweird.f32 %v106
    %vm114 = vmor %vm112, %vm113
    %v115 = vsel %vm114, %v106, %v111
    %v116 = vrsqrt.pop %v105
    %v117 = vmul.f32 %v116, %v105
    %v118 = vmul.f32 %v117, %v116
    %v119 = vmul.f32 0.5, %v118
    %v120 = vsub.f32 1.5, %v119
    %v121 = vmul.f32 %v116, %v120
    %vm122 = vweird.f32 %v105
    %vm123 = vweird.f32 %v116
    %vm124 = vmor %vm122, %vm123
    %v125 = vsel %vm124, %v116, %v121
    %v126 = vmul.f32 %v80, %v115
    %v127 = vmul.f32 %v83, %v125
    %v128 = vperm.slane %v85, 0
    %v129 = vmul.f32 %v126, %v128
    %v130 = vmul.f32 %v127, %v128
    %v131 = vld [vmem:[%s4] sm:$0xff]
    %v132 = vld [vmem:[%s4 + $0x8] sm:$0xff]
    %v133 = vld [vmem:[%s4 + $0x10] sm:$0xff]
    %v134 = vld [vmem:[%s4 + $0x18] sm:$0xff]
    %v135 = vld [vmem:[%s4 + $0x20] sm:$0xff]
    %v136 = vld [vmem:[%s4 + $0x28] sm:$0xff]
    %v137 = vld [vmem:[%s4 + $0x30] sm:$0xff]
    %v138 = vld [vmem:[%s4 + $0x38] sm:$0xff]
    %v140 = vsel %vm88, %v129, 0
    %v143 = vsel %vm88, %v130, 0
    %145 = vmatpush.msra.mxu0 0.0
    %146 = vmatpush.msra.mxu0 0.0
    %147 = vmatpush.msra.mxu0 0.0
    %148 = vmatpush.msra.mxu0 0.0
    %149 = vmatpush.msra.mxu0 0.0
    %150 = vmatpush.msra.mxu0 0.0
    %151 = vmatpush.msra.mxu0 0.0
    %152 = vmatpush.msra.mxu0 0.0
    %153 = vmatpush.msra.mxu0 %v138
    %154 = vmatpush.msra.mxu0 %v137
    %155 = vmatpush.msra.mxu0 %v136
    %156 = vmatpush.msra.mxu0 %v135
    %157 = vmatpush.msra.mxu0 %v134
    %158 = vmatpush.msra.mxu0 %v133
    %159 = vmatpush.msra.mxu0 %v132
    %160 = vmatpush.msra.mxu0 %v131
    %161 = vmatmul.f32.gmra.mxu0 %v140
    %v162 = vpop.f32.mrf.mxu0
    %v163 = vadd.f32 0.0, %v162
    %164 = vmatmul.f32.gmra.mxu0 %v143
    %v165 = vpop.f32.mrf.mxu0
    %v166 = vadd.f32 0.0, %v165
    %167 = vdwg.mxu0
    %v168 = vtanh.pop %v163
    %v169 = vtanh.pop %v166
    %v170 = vld [vmem:[%s5] sm:$0x1]
    %v172 = vperm.slane %v170, 0
    %v174 = vmul.f32 %v168, %v172
    %v175 = vmul.f32 %v169, %v172
    %v176 = vld [vmem:[%s6] sm:$0xff]
    %v177 = vld [vmem:[%s6 + $0x8] sm:$0xff]
    %v178 = vld [vmem:[%s6 + $0x10] sm:$0xff]
    %v179 = vld [vmem:[%s6 + $0x18] sm:$0xff]
    %v180 = vld [vmem:[%s6 + $0x20] sm:$0xff]
    %v181 = vld [vmem:[%s6 + $0x28] sm:$0xff]
    %v182 = vld [vmem:[%s6 + $0x30] sm:$0xff]
    %v183 = vld [vmem:[%s6 + $0x38] sm:$0xff]
    %v184 = vadd.f32 %v176, %v178
    %v185 = vadd.f32 %v177, %v179
    %v186 = vadd.f32 %v184, %v180
    %v187 = vadd.f32 %v185, %v181
    %v188 = vadd.f32 %v186, %v182
    %v189 = vadd.f32 %v187, %v183
    %v190 = vmul.f32 %v174, 4.0
    %v191 = vmul.f32 %v175, 4.0
    %v192 = vadd.f32 %v190, %v188
    %v193 = vadd.f32 %v191, %v189
    %195 = vset.pattern.permute.xlu0 0
    %196 = vperm.xlu0 %195, %v192
    %v197 = vpop.permute.xlu0 %196
    %200 = vset.pattern.permute.xlu0 0
    %201 = vperm.xlu0 %200, %v193
    %v202 = vpop.permute.xlu0 %201
    %v204 = vmul.f32 %v197, %v80
    %v205 = vmul.f32 %v202, %v83
    %v206 = vld [vmem:[%s7] sm:$0x1]
    %v207 = vmul.f32 %v204, %v204
    %v208 = vmul.f32 %v205, %v205
    %v209 = vsel %vm88, %v207, 0.0
    %210 = vadd.xlane.f32.xlu0 %v209
    %v211 = vpop.xlane.xlu0 %210
    %v212 = vsel %vm88, %v208, 0.0
    %213 = vadd.xlane.f32.xlu0 %v212
    %v214 = vpop.xlane.xlu0 %213
    %v215 = vmul.f32 %v211, %v101
    %v216 = vmul.f32 %v214, %v101
    %v217 = vadd.f32 %v215, 1.1920929e-07
    %v218 = vadd.f32 %v216, 1.1920929e-07
    %v219 = vrsqrt.pop %v217
    %v220 = vmul.f32 %v219, %v217
    %v221 = vmul.f32 %v220, %v219
    %v222 = vmul.f32 0.5, %v221
    %v223 = vsub.f32 1.5, %v222
    %v224 = vmul.f32 %v219, %v223
    %vm225 = vweird.f32 %v217
    %vm226 = vweird.f32 %v219
    %vm227 = vmor %vm225, %vm226
    %v228 = vsel %vm227, %v219, %v224
    %v229 = vrsqrt.pop %v218
    %v230 = vmul.f32 %v229, %v218
    %v231 = vmul.f32 %v230, %v229
    %v232 = vmul.f32 0.5, %v231
    %v233 = vsub.f32 1.5, %v232
    %v234 = vmul.f32 %v229, %v233
    %vm235 = vweird.f32 %v218
    %vm236 = vweird.f32 %v229
    %vm237 = vmor %vm235, %vm236
    %v238 = vsel %vm237, %v229, %v234
    %v239 = vmul.f32 %v204, %v228
    %v240 = vmul.f32 %v205, %v238
    %v241 = vperm.slane %v206, 0
    %v242 = vmul.f32 %v239, %v241
    %v243 = vmul.f32 %v240, %v241
    %v244 = vld [vmem:[%s8] sm:$0xff]
    %v245 = vld [vmem:[%s8 + $0x8] sm:$0xff]
    %v246 = vld [vmem:[%s8 + $0x10] sm:$0xff]
    %v247 = vld [vmem:[%s8 + $0x18] sm:$0xff]
    %v248 = vld [vmem:[%s8 + $0x20] sm:$0xff]
    %v249 = vld [vmem:[%s8 + $0x28] sm:$0xff]
    %v250 = vld [vmem:[%s8 + $0x30] sm:$0xff]
    %v251 = vld [vmem:[%s8 + $0x38] sm:$0xff]
    %v252 = vld [vmem:[%s9] sm:$0x1]
    %v253 = vperm.slane %v252, 0
    %v255 = vsel %vm88, %v242, 0
    %v258 = vsel %vm88, %v243, 0
    %260 = vmatpush.msra.mxu0 0.0
    %261 = vmatpush.msra.mxu0 0.0
    %262 = vmatpush.msra.mxu0 0.0
    %263 = vmatpush.msra.mxu0 0.0
    %264 = vmatpush.msra.mxu0 0.0
    %265 = vmatpush.msra.mxu0 0.0
    %266 = vmatpush.msra.mxu0 0.0
    %267 = vmatpush.msra.mxu0 0.0
    %268 = vmatpush.msra.mxu0 %v251
    %269 = vmatpush.msra.mxu0 %v250
    %270 = vmatpush.msra.mxu0 %v249
    %271 = vmatpush.msra.mxu0 %v248
    %272 = vmatpush.msra.mxu0 %v247
    %273 = vmatpush.msra.mxu0 %v246
    %274 = vmatpush.msra.mxu0 %v245
    %275 = vmatpush.msra.mxu0 %v244
    %276 = vmatmul.f32.gmra.mxu0 %v255
    %v277 = vpop.f32.mrf.mxu0
    %v278 = vadd.f32 %v253, %v277
    %279 = vmatmul.f32.gmra.mxu0 %v258
    %v280 = vpop.f32.mrf.mxu0
    %v281 = vadd.f32 %v253, %v280
    %282 = vdwg.mxu0
    %v283 = vmax.f32 %v278, 0.0
    %v284 = vmax.f32 %v281, 0.0
    %v285 = vmul.f32 %v283, %v283
    %v286 = vmul.f32 %v284, %v284
    %v287 = vld [vmem:[%s10] sm:$0xff]
    %v288 = vld [vmem:[%s10 + $0x8] sm:$0xff]
    %v289 = vld [vmem:[%s10 + $0x10] sm:$0xff]
    %v290 = vld [vmem:[%s10 + $0x18] sm:$0xff]
    %v291 = vld [vmem:[%s10 + $0x20] sm:$0xff]
    %v292 = vld [vmem:[%s10 + $0x28] sm:$0xff]
    %v293 = vld [vmem:[%s10 + $0x30] sm:$0xff]
    %v294 = vld [vmem:[%s10 + $0x38] sm:$0xff]
    %v295 = vld [vmem:[%s10 + $0x40] sm:$0xff]
    %v296 = vld [vmem:[%s10 + $0x48] sm:$0xff]
    %v297 = vld [vmem:[%s10 + $0x50] sm:$0xff]
    %v298 = vld [vmem:[%s10 + $0x58] sm:$0xff]
    %v299 = vld [vmem:[%s10 + $0x60] sm:$0xff]
    %v300 = vld [vmem:[%s10 + $0x68] sm:$0xff]
    %v301 = vld [vmem:[%s10 + $0x70] sm:$0xff]
    %v302 = vld [vmem:[%s10 + $0x78] sm:$0xff]
    %v303 = vld [vmem:[%s11] sm:$0x1]
    %v304 = vperm.slane %v303, 0
    %305 = vmatpush.msra.mxu0 %v302
    %306 = vmatpush.msra.mxu0 %v301
    %307 = vmatpush.msra.mxu0 %v300
    %308 = vmatpush.msra.mxu0 %v299
    %309 = vmatpush.msra.mxu0 %v298
    %310 = vmatpush.msra.mxu0 %v297
    %311 = vmatpush.msra.mxu0 %v296
    %312 = vmatpush.msra.mxu0 %v295
    %313 = vmatpush.msra.mxu0 %v294
    %314 = vmatpush.msra.mxu0 %v293
    %315 = vmatpush.msra.mxu0 %v292
    %316 = vmatpush.msra.mxu0 %v291
    %317 = vmatpush.msra.mxu0 %v290
    %318 = vmatpush.msra.mxu0 %v289
    %319 = vmatpush.msra.mxu0 %v288
    %320 = vmatpush.msra.mxu0 %v287
    %321 = vmatmul.f32.gmra.mxu0 %v285
    %v322 = vpop.f32.mrf.mxu0
    %v323 = vadd.f32 %v304, %v322
    %324 = vmatmul.f32.gmra.mxu0 %v286
    %v325 = vpop.f32.mrf.mxu0
    %v326 = vadd.f32 %v304, %v325
    %327 = vdwg.mxu0
    %v328 = vadd.f32 %v174, %v176
    %v329 = vadd.f32 %v175, %v177
    %330 = vset.pattern.permute.xlu0 1
    %331 = vperm.xlu0 %330, %v192
    %v332 = vpop.permute.xlu0 %331
    %334 = vset.pattern.permute.xlu0 1
    %335 = vperm.xlu0 %334, %v193
    %v336 = vpop.permute.xlu0 %335
    %v338 = vmul.f32 %v332, %v80
    %v339 = vmul.f32 %v336, %v83
    %341 = vset.pattern.permute.xlu0 5
    %342 = vperm.xlu0 %341, %v328
    %v343 = vpop.permute.xlu0 %342
    %346 = vset.pattern.permute.xlu0 5
    %347 = vperm.xlu0 %346, %v329
    %v348 = vpop.permute.xlu0 %347
    %v350 = vmul.f32 %v343, %v323
    %v351 = vmul.f32 %v348, %v326
    %v352 = vadd.f32 %v338, %v350
    %v353 = vadd.f32 %v339, %v351
    %v354 = vadd.f32 %v174, %v178
    %v355 = vadd.f32 %v175, %v179
    %356 = vset.pattern.permute.xlu0 2
    %357 = vperm.xlu0 %356, %v192
    %v358 = vpop.permute.xlu0 %357
    %360 = vset.pattern.permute.xlu0 2
    %361 = vperm.xlu0 %360, %v193
    %v362 = vpop.permute.xlu0 %361
    %v364 = vmul.f32 %v358, %v80
    %v365 = vmul.f32 %v362, %v83
    %367 = vset.pattern.permute.xlu0 5
    %368 = vperm.xlu0 %367, %v354
    %v369 = vpop.permute.xlu0 %368
    %372 = vset.pattern.permute.xlu0 5
    %373 = vperm.xlu0 %372, %v355
    %v374 = vpop.permute.xlu0 %373
    %v376 = vmul.f32 %v369, %v323
    %v377 = vmul.f32 %v374, %v326
    %v378 = vadd.f32 %v364, %v376
    %v379 = vadd.f32 %v365, %v377
    %v380 = vadd.f32 %v174, %v180
    %v381 = vadd.f32 %v175, %v181
    %382 = vset.pattern.permute.xlu0 3
    %383 = vperm.xlu0 %382, %v192
    %v384 = vpop.permute.xlu0 %383
    %386 = vset.pattern.permute.xlu0 3
    %387 = vperm.xlu0 %386, %v193
    %v388 = vpop.permute.xlu0 %387
    %v390 = vmul.f32 %v384, %v80
    %v391 = vmul.f32 %v388, %v83
    %393 = vset.pattern.permute.xlu0 5
    %394 = vperm.xlu0 %393, %v380
    %v395 = vpop.permute.xlu0 %394
    %398 = vset.pattern.permute.xlu0 5
    %399 = vperm.xlu0 %398, %v381
    %v400 = vpop.permute.xlu0 %399
    %v402 = vmul.f32 %v395, %v323
    %v403 = vmul.f32 %v400, %v326
    %v404 = vadd.f32 %v390, %v402
    %v405 = vadd.f32 %v391, %v403
    %v406 = vadd.f32 %v174, %v182
    %v407 = vadd.f32 %v175, %v183
    %408 = vset.pattern.permute.xlu0 4
    %409 = vperm.xlu0 %408, %v192
    %v410 = vpop.permute.xlu0 %409
    %412 = vset.pattern.permute.xlu0 4
    %413 = vperm.xlu0 %412, %v193
    %v414 = vpop.permute.xlu0 %413
    %v416 = vmul.f32 %v410, %v80
    %v417 = vmul.f32 %v414, %v83
    %419 = vset.pattern.permute.xlu0 5
    %420 = vperm.xlu0 %419, %v406
    %v421 = vpop.permute.xlu0 %420
    %424 = vset.pattern.permute.xlu0 5
    %425 = vperm.xlu0 %424, %v407
    %v426 = vpop.permute.xlu0 %425
    %v428 = vmul.f32 %v421, %v323
    %v429 = vmul.f32 %v426, %v326
    %v430 = vadd.f32 %v416, %v428
    %v431 = vadd.f32 %v417, %v429
    %v432 = vld [vmem:[%s3 + $0x1] sm:$0x1]
    %v433 = vmul.f32 %v352, %v352
    %v434 = vmul.f32 %v353, %v353
    %v435 = vmul.f32 %v378, %v378
    %v436 = vmul.f32 %v379, %v379
    %v437 = vmul.f32 %v404, %v404
    %v438 = vmul.f32 %v405, %v405
    %v439 = vmul.f32 %v430, %v430
    %v440 = vmul.f32 %v431, %v431
    %v441 = vsel %vm88, %v433, 0.0
    %442 = vadd.xlane.f32.xlu0 %v441
    %v443 = vpop.xlane.xlu0 %442
    %v444 = vsel %vm88, %v434, 0.0
    %445 = vadd.xlane.f32.xlu0 %v444
    %v446 = vpop.xlane.xlu0 %445
    %v447 = vsel %vm88, %v435, 0.0
    %448 = vadd.xlane.f32.xlu0 %v447
    %v449 = vpop.xlane.xlu0 %448
    %v450 = vsel %vm88, %v436, 0.0
    %451 = vadd.xlane.f32.xlu0 %v450
    %v452 = vpop.xlane.xlu0 %451
    %v453 = vsel %vm88, %v437, 0.0
    %454 = vadd.xlane.f32.xlu0 %v453
    %v455 = vpop.xlane.xlu0 %454
    %v456 = vsel %vm88, %v438, 0.0
    %457 = vadd.xlane.f32.xlu0 %v456
    %v458 = vpop.xlane.xlu0 %457
    %v459 = vsel %vm88, %v439, 0.0
    %460 = vadd.xlane.f32.xlu0 %v459
    %v461 = vpop.xlane.xlu0 %460
    %v462 = vsel %vm88, %v440, 0.0
    %463 = vadd.xlane.f32.xlu0 %v462
    %v464 = vpop.xlane.xlu0 %463
    %v465 = vmul.f32 %v443, %v101
    %v466 = vmul.f32 %v446, %v101
    %v467 = vmul.f32 %v449, %v101
    %v468 = vmul.f32 %v452, %v101
    %v469 = vmul.f32 %v455, %v101
    %v470 = vmul.f32 %v458, %v101
    %v471 = vmul.f32 %v461, %v101
    %v472 = vmul.f32 %v464, %v101
    %v473 = vadd.f32 %v465, 1.1920929e-07
    %v474 = vadd.f32 %v466, 1.1920929e-07
    %v475 = vadd.f32 %v467, 1.1920929e-07
    %v476 = vadd.f32 %v468, 1.1920929e-07
    %v477 = vadd.f32 %v469, 1.1920929e-07
    %v478 = vadd.f32 %v470, 1.1920929e-07
    %v479 = vadd.f32 %v471, 1.1920929e-07
    %v480 = vadd.f32 %v472, 1.1920929e-07
    %v481 = vrsqrt.pop %v473
    %v482 = vmul.f32 %v481, %v473
    %v483 = vmul.f32 %v482, %v481
    %v484 = vmul.f32 0.5, %v483
    %v485 = vsub.f32 1.5, %v484
    %v486 = vmul.f32 %v481, %v485
    %vm487 = vweird.f32 %v473
    %vm488 = vweird.f32 %v481
    %vm489 = vmor %vm487, %vm488
    %v490 = vsel %vm489, %v481, %v486
    %v491 = vrsqrt.pop %v474
    %v492 = vmul.f32 %v491, %v474
    %v493 = vmul.f32 %v492, %v491
    %v494 = vmul.f32 0.5, %v493
    %v495 = vsub.f32 1.5, %v494
    %v496 = vmul.f32 %v491, %v495
    %vm497 = vweird.f32 %v474
    %vm498 = vweird.f32 %v491
    %vm499 = vmor %vm497, %vm498
    %v500 = vsel %vm499, %v491, %v496
    %v501 = vrsqrt.pop %v475
    %v502 = vmul.f32 %v501, %v475
    %v503 = vmul.f32 %v502, %v501
    %v504 = vmul.f32 0.5, %v503
    %v505 = vsub.f32 1.5, %v504
    %v506 = vmul.f32 %v501, %v505
    %vm507 = vweird.f32 %v475
    %vm508 = vweird.f32 %v501
    %vm509 = vmor %vm507, %vm508
    %v510 = vsel %vm509, %v501, %v506
    %v511 = vrsqrt.pop %v476
    %v512 = vmul.f32 %v511, %v476
    %v513 = vmul.f32 %v512, %v511
    %v514 = vmul.f32 0.5, %v513
    %v515 = vsub.f32 1.5, %v514
    %v516 = vmul.f32 %v511, %v515
    %vm517 = vweird.f32 %v476
    %vm518 = vweird.f32 %v511
    %vm519 = vmor %vm517, %vm518
    %v520 = vsel %vm519, %v511, %v516
    %v521 = vrsqrt.pop %v477
    %v522 = vmul.f32 %v521, %v477
    %v523 = vmul.f32 %v522, %v521
    %v524 = vmul.f32 0.5, %v523
    %v525 = vsub.f32 1.5, %v524
    %v526 = vmul.f32 %v521, %v525
    %vm527 = vweird.f32 %v477
    %vm528 = vweird.f32 %v521
    %vm529 = vmor %vm527, %vm528
    %v530 = vsel %vm529, %v521, %v526
    %v531 = vrsqrt.pop %v478
    %v532 = vmul.f32 %v531, %v478
    %v533 = vmul.f32 %v532, %v531
    %v534 = vmul.f32 0.5, %v533
    %v535 = vsub.f32 1.5, %v534
    %v536 = vmul.f32 %v531, %v535
    %vm537 = vweird.f32 %v478
    %vm538 = vweird.f32 %v531
    %vm539 = vmor %vm537, %vm538
    %v540 = vsel %vm539, %v531, %v536
    %v541 = vrsqrt.pop %v479
    %v542 = vmul.f32 %v541, %v479
    %v543 = vmul.f32 %v542, %v541
    %v544 = vmul.f32 0.5, %v543
    %v545 = vsub.f32 1.5, %v544
    %v546 = vmul.f32 %v541, %v545
    %vm547 = vweird.f32 %v479
    %vm548 = vweird.f32 %v541
    %vm549 = vmor %vm547, %vm548
    %v550 = vsel %vm549, %v541, %v546
    %v551 = vrsqrt.pop %v480
    %v552 = vmul.f32 %v551, %v480
    %v553 = vmul.f32 %v552, %v551
    %v554 = vmul.f32 0.5, %v553
    %v555 = vsub.f32 1.5, %v554
    %v556 = vmul.f32 %v551, %v555
    %vm557 = vweird.f32 %v480
    %vm558 = vweird.f32 %v551
    %vm559 = vmor %vm557, %vm558
    %v560 = vsel %vm559, %v551, %v556
    %v561 = vmul.f32 %v352, %v490
    %v562 = vmul.f32 %v353, %v500
    %v563 = vmul.f32 %v378, %v510
    %v564 = vmul.f32 %v379, %v520
    %v565 = vmul.f32 %v404, %v530
    %v566 = vmul.f32 %v405, %v540
    %v567 = vmul.f32 %v430, %v550
    %v568 = vmul.f32 %v431, %v560
    %v569 = vperm.slane %v432, 0
    %v570 = vmul.f32 %v561, %v569
    %v571 = vmul.f32 %v562, %v569
    %v572 = vmul.f32 %v563, %v569
    %v573 = vmul.f32 %v564, %v569
    %v574 = vmul.f32 %v565, %v569
    %v575 = vmul.f32 %v566, %v569
    %v576 = vmul.f32 %v567, %v569
    %v577 = vmul.f32 %v568, %v569
    %s578 = scalar_lea.vmem %s4, 64
    %v579 = vld [vmem:[%s578] sm:$0xff]
    %v580 = vld [vmem:[%s578 + $0x8] sm:$0xff]
    %v581 = vld [vmem:[%s578 + $0x10] sm:$0xff]
    %v582 = vld [vmem:[%s578 + $0x18] sm:$0xff]
    %v583 = vld [vmem:[%s578 + $0x20] sm:$0xff]
    %v584 = vld [vmem:[%s578 + $0x28] sm:$0xff]
    %v585 = vld [vmem:[%s578 + $0x30] sm:$0xff]
    %v586 = vld [vmem:[%s578 + $0x38] sm:$0xff]
    %v588 = vsel %vm88, %v570, 0
    %v591 = vsel %vm88, %v571, 0
    %v594 = vsel %vm88, %v572, 0
    %v597 = vsel %vm88, %v573, 0
    %v600 = vsel %vm88, %v574, 0
    %v603 = vsel %vm88, %v575, 0
    %v606 = vsel %vm88, %v576, 0
    %v609 = vsel %vm88, %v577, 0
    %611 = vmatpush.msra.mxu0 0.0
    %612 = vmatpush.msra.mxu0 0.0
    %613 = vmatpush.msra.mxu0 0.0
    %614 = vmatpush.msra.mxu0 0.0
    %615 = vmatpush.msra.mxu0 0.0
    %616 = vmatpush.msra.mxu0 0.0
    %617 = vmatpush.msra.mxu0 0.0
    %618 = vmatpush.msra.mxu0 0.0
    %619 = vmatpush.msra.mxu0 %v586
    %620 = vmatpush.msra.mxu0 %v585
    %621 = vmatpush.msra.mxu0 %v584
    %622 = vmatpush.msra.mxu0 %v583
    %623 = vmatpush.msra.mxu0 %v582
    %624 = vmatpush.msra.mxu0 %v581
    %625 = vmatpush.msra.mxu0 %v580
    %626 = vmatpush.msra.mxu0 %v579
    %627 = vmatmul.f32.gmra.mxu0 %v588
    %v628 = vpop.f32.mrf.mxu0
    %v629 = vadd.f32 0.0, %v628
    %630 = vmatmul.f32.gmra.mxu0 %v591
    %v631 = vpop.f32.mrf.mxu0
    %v632 = vadd.f32 0.0, %v631
    %633 = vmatmul.f32.gmra.mxu0 %v594
    %v634 = vpop.f32.mrf.mxu0
    %v635 = vadd.f32 0.0, %v634
    %636 = vmatmul.f32.gmra.mxu0 %v597
    %v637 = vpop.f32.mrf.mxu0
    %v638 = vadd.f32 0.0, %v637
    %639 = vmatmul.f32.gmra.mxu0 %v600
    %v640 = vpop.f32.mrf.mxu0
    %v641 = vadd.f32 0.0, %v640
    %642 = vmatmul.f32.gmra.mxu0 %v603
    %v643 = vpop.f32.mrf.mxu0
    %v644 = vadd.f32 0.0, %v643
    %645 = vmatmul.f32.gmra.mxu0 %v606
    %v646 = vpop.f32.mrf.mxu0
    %v647 = vadd.f32 0.0, %v646
    %648 = vmatmul.f32.gmra.mxu0 %v609
    %v649 = vpop.f32.mrf.mxu0
    %v650 = vadd.f32 0.0, %v649
    %651 = vdwg.mxu0
    %v652 = vtanh.pop %v629
    %v653 = vtanh.pop %v632
    %v654 = vtanh.pop %v635
    %v655 = vtanh.pop %v638
    %v656 = vtanh.pop %v641
    %v657 = vtanh.pop %v644
    %v658 = vtanh.pop %v647
    %v659 = vtanh.pop %v650
    %s660 = scalar_lea.vmem %s5, 1
    %v661 = vld [vmem:[%s660] sm:$0x1]
    %v663 = vperm.slane %v661, 0
    %v665 = vmul.f32 %v652, %v663
    %v666 = vmul.f32 %v653, %v663
    %v667 = vmul.f32 %v654, %v663
    %v668 = vmul.f32 %v655, %v663
    %v669 = vmul.f32 %v656, %v663
    %v670 = vmul.f32 %v657, %v663
    %v671 = vmul.f32 %v658, %v663
    %v672 = vmul.f32 %v659, %v663
    %s673 = scalar_lea.vmem %s6, 64
    %v674 = vld [vmem:[%s673] sm:$0xff]
    %v675 = vld [vmem:[%s673 + $0x8] sm:$0xff]
    %v676 = vld [vmem:[%s673 + $0x10] sm:$0xff]
    %v677 = vld [vmem:[%s673 + $0x18] sm:$0xff]
    %v678 = vld [vmem:[%s673 + $0x20] sm:$0xff]
    %v679 = vld [vmem:[%s673 + $0x28] sm:$0xff]
    %v680 = vld [vmem:[%s673 + $0x30] sm:$0xff]
    %v681 = vld [vmem:[%s673 + $0x38] sm:$0xff]
    %v682 = vadd.f32 %v665, %v674
    %v683 = vadd.f32 %v666, %v675
    %v684 = vadd.f32 %v667, %v676
    %v685 = vadd.f32 %v668, %v677
    %v686 = vadd.f32 %v669, %v678
    %v687 = vadd.f32 %v670, %v679
    %v688 = vadd.f32 %v671, %v680
    %v689 = vadd.f32 %v672, %v681
    %691 = vset.pattern.permute.xlu0 0
    %692 = vperm.xlu0 %691, %v682
    %v693 = vpop.permute.xlu0 %692
    %696 = vset.pattern.permute.xlu0 0
    %697 = vperm.xlu0 %696, %v683
    %v698 = vpop.permute.xlu0 %697
    %v700 = vmul.f32 %v693, %v352
    %v701 = vmul.f32 %v698, %v353
    %703 = vset.pattern.permute.xlu0 0
    %704 = vperm.xlu0 %703, %v684
    %v705 = vpop.permute.xlu0 %704
    %708 = vset.pattern.permute.xlu0 0
    %709 = vperm.xlu0 %708, %v685
    %v710 = vpop.permute.xlu0 %709
    %v712 = vmul.f32 %v705, %v378
    %v713 = vmul.f32 %v710, %v379
    %v714 = vadd.f32 %v700, %v712
    %v715 = vadd.f32 %v701, %v713
    %717 = vset.pattern.permute.xlu0 0
    %718 = vperm.xlu0 %717, %v686
    %v719 = vpop.permute.xlu0 %718
    %722 = vset.pattern.permute.xlu0 0
    %723 = vperm.xlu0 %722, %v687
    %v724 = vpop.permute.xlu0 %723
    %v726 = vmul.f32 %v719, %v404
    %v727 = vmul.f32 %v724, %v405
    %v728 = vadd.f32 %v714, %v726
    %v729 = vadd.f32 %v715, %v727
    %731 = vset.pattern.permute.xlu0 0
    %732 = vperm.xlu0 %731, %v688
    %v733 = vpop.permute.xlu0 %732
    %736 = vset.pattern.permute.xlu0 0
    %737 = vperm.xlu0 %736, %v689
    %v738 = vpop.permute.xlu0 %737
    %v740 = vmul.f32 %v733, %v430
    %v741 = vmul.f32 %v738, %v431
    %v742 = vadd.f32 %v728, %v740
    %v743 = vadd.f32 %v729, %v741
    %744 = vset.pattern.permute.xlu0 1
    %745 = vperm.xlu0 %744, %v682
    %v746 = vpop.permute.xlu0 %745
    %748 = vset.pattern.permute.xlu0 1
    %749 = vperm.xlu0 %748, %v683
    %v750 = vpop.permute.xlu0 %749
    %v752 = vmul.f32 %v746, %v352
    %v753 = vmul.f32 %v750, %v353
    %754 = vset.pattern.permute.xlu0 1
    %755 = vperm.xlu0 %754, %v684
    %v756 = vpop.permute.xlu0 %755
    %758 = vset.pattern.permute.xlu0 1
    %759 = vperm.xlu0 %758, %v685
    %v760 = vpop.permute.xlu0 %759
    %v762 = vmul.f32 %v756, %v378
    %v763 = vmul.f32 %v760, %v379
    %v764 = vadd.f32 %v752, %v762
    %v765 = vadd.f32 %v753, %v763
    %766 = vset.pattern.permute.xlu0 1
    %767 = vperm.xlu0 %766, %v686
    %v768 = vpop.permute.xlu0 %767
    %770 = vset.pattern.permute.xlu0 1
    %771 = vperm.xlu0 %770, %v687
    %v772 = vpop.permute.xlu0 %771
    %v774 = vmul.f32 %v768, %v404
    %v775 = vmul.f32 %v772, %v405
    %v776 = vadd.f32 %v764, %v774
    %v777 = vadd.f32 %v765, %v775
    %778 = vset.pattern.permute.xlu0 1
    %779 = vperm.xlu0 %778, %v688
    %v780 = vpop.permute.xlu0 %779
    %782 = vset.pattern.permute.xlu0 1
    %783 = vperm.xlu0 %782, %v689
    %v784 = vpop.permute.xlu0 %783
    %v786 = vmul.f32 %v780, %v430
    %v787 = vmul.f32 %v784, %v431
    %v788 = vadd.f32 %v776, %v786
    %v789 = vadd.f32 %v777, %v787
    %790 = vset.pattern.permute.xlu0 2
    %791 = vperm.xlu0 %790, %v682
    %v792 = vpop.permute.xlu0 %791
    %794 = vset.pattern.permute.xlu0 2
    %795 = vperm.xlu0 %794, %v683
    %v796 = vpop.permute.xlu0 %795
    %v798 = vmul.f32 %v792, %v352
    %v799 = vmul.f32 %v796, %v353
    %800 = vset.pattern.permute.xlu0 2
    %801 = vperm.xlu0 %800, %v684
    %v802 = vpop.permute.xlu0 %801
    %804 = vset.pattern.permute.xlu0 2
    %805 = vperm.xlu0 %804, %v685
    %v806 = vpop.permute.xlu0 %805
    %v808 = vmul.f32 %v802, %v378
    %v809 = vmul.f32 %v806, %v379
    %v810 = vadd.f32 %v798, %v808
    %v811 = vadd.f32 %v799, %v809
    %812 = vset.pattern.permute.xlu0 2
    %813 = vperm.xlu0 %812, %v686
    %v814 = vpop.permute.xlu0 %813
    %816 = vset.pattern.permute.xlu0 2
    %817 = vperm.xlu0 %816, %v687
    %v818 = vpop.permute.xlu0 %817
    %v820 = vmul.f32 %v814, %v404
    %v821 = vmul.f32 %v818, %v405
    %v822 = vadd.f32 %v810, %v820
    %v823 = vadd.f32 %v811, %v821
    %824 = vset.pattern.permute.xlu0 2
    %825 = vperm.xlu0 %824, %v688
    %v826 = vpop.permute.xlu0 %825
    %828 = vset.pattern.permute.xlu0 2
    %829 = vperm.xlu0 %828, %v689
    %v830 = vpop.permute.xlu0 %829
    %v832 = vmul.f32 %v826, %v430
    %v833 = vmul.f32 %v830, %v431
    %v834 = vadd.f32 %v822, %v832
    %v835 = vadd.f32 %v823, %v833
    %836 = vset.pattern.permute.xlu0 3
    %837 = vperm.xlu0 %836, %v682
    %v838 = vpop.permute.xlu0 %837
    %840 = vset.pattern.permute.xlu0 3
    %841 = vperm.xlu0 %840, %v683
    %v842 = vpop.permute.xlu0 %841
    %v844 = vmul.f32 %v838, %v352
    %v845 = vmul.f32 %v842, %v353
    %846 = vset.pattern.permute.xlu0 3
    %847 = vperm.xlu0 %846, %v684
    %v848 = vpop.permute.xlu0 %847
    %850 = vset.pattern.permute.xlu0 3
    %851 = vperm.xlu0 %850, %v685
    %v852 = vpop.permute.xlu0 %851
    %v854 = vmul.f32 %v848, %v378
    %v855 = vmul.f32 %v852, %v379
    %v856 = vadd.f32 %v844, %v854
    %v857 = vadd.f32 %v845, %v855
    %858 = vset.pattern.permute.xlu0 3
    %859 = vperm.xlu0 %858, %v686
    %v860 = vpop.permute.xlu0 %859
    %862 = vset.pattern.permute.xlu0 3
    %863 = vperm.xlu0 %862, %v687
    %v864 = vpop.permute.xlu0 %863
    %v866 = vmul.f32 %v860, %v404
    %v867 = vmul.f32 %v864, %v405
    %v868 = vadd.f32 %v856, %v866
    %v869 = vadd.f32 %v857, %v867
    %870 = vset.pattern.permute.xlu0 3
    %871 = vperm.xlu0 %870, %v688
    %v872 = vpop.permute.xlu0 %871
    %874 = vset.pattern.permute.xlu0 3
    %875 = vperm.xlu0 %874, %v689
    %v876 = vpop.permute.xlu0 %875
    %v878 = vmul.f32 %v872, %v430
    %v879 = vmul.f32 %v876, %v431
    %v880 = vadd.f32 %v868, %v878
    %v881 = vadd.f32 %v869, %v879
    %882 = vset.pattern.permute.xlu0 4
    %883 = vperm.xlu0 %882, %v682
    %v884 = vpop.permute.xlu0 %883
    %886 = vset.pattern.permute.xlu0 4
    %887 = vperm.xlu0 %886, %v683
    %v888 = vpop.permute.xlu0 %887
    %v890 = vmul.f32 %v884, %v352
    %v891 = vmul.f32 %v888, %v353
    %892 = vset.pattern.permute.xlu0 4
    %893 = vperm.xlu0 %892, %v684
    %v894 = vpop.permute.xlu0 %893
    %896 = vset.pattern.permute.xlu0 4
    %897 = vperm.xlu0 %896, %v685
    %v898 = vpop.permute.xlu0 %897
    %v900 = vmul.f32 %v894, %v378
    %v901 = vmul.f32 %v898, %v379
    %v902 = vadd.f32 %v890, %v900
    %v903 = vadd.f32 %v891, %v901
    %904 = vset.pattern.permute.xlu0 4
    %905 = vperm.xlu0 %904, %v686
    %v906 = vpop.permute.xlu0 %905
    %908 = vset.pattern.permute.xlu0 4
    %909 = vperm.xlu0 %908, %v687
    %v910 = vpop.permute.xlu0 %909
    %v912 = vmul.f32 %v906, %v404
    %v913 = vmul.f32 %v910, %v405
    %v914 = vadd.f32 %v902, %v912
    %v915 = vadd.f32 %v903, %v913
    %916 = vset.pattern.permute.xlu0 4
    %917 = vperm.xlu0 %916, %v688
    %v918 = vpop.permute.xlu0 %917
    %920 = vset.pattern.permute.xlu0 4
    %921 = vperm.xlu0 %920, %v689
    %v922 = vpop.permute.xlu0 %921
    %v924 = vmul.f32 %v918, %v430
    %v925 = vmul.f32 %v922, %v431
    %v926 = vadd.f32 %v914, %v924
    %v927 = vadd.f32 %v915, %v925
    %v928 = vld [vmem:[%s7 + $0x1] sm:$0x1]
    %v929 = vmul.f32 %v742, %v742
    %v930 = vmul.f32 %v743, %v743
    %v931 = vsel %vm88, %v929, 0.0
    %932 = vadd.xlane.f32.xlu0 %v931
    %v933 = vpop.xlane.xlu0 %932
    %v934 = vsel %vm88, %v930, 0.0
    %935 = vadd.xlane.f32.xlu0 %v934
    %v936 = vpop.xlane.xlu0 %935
    %v937 = vmul.f32 %v933, %v101
    %v938 = vmul.f32 %v936, %v101
    %v939 = vadd.f32 %v937, 1.1920929e-07
    %v940 = vadd.f32 %v938, 1.1920929e-07
    %v941 = vrsqrt.pop %v939
    %v942 = vmul.f32 %v941, %v939
    %v943 = vmul.f32 %v942, %v941
    %v944 = vmul.f32 0.5, %v943
    %v945 = vsub.f32 1.5, %v944
    %v946 = vmul.f32 %v941, %v945
    %vm947 = vweird.f32 %v939
    %vm948 = vweird.f32 %v941
    %vm949 = vmor %vm947, %vm948
    %v950 = vsel %vm949, %v941, %v946
    %v951 = vrsqrt.pop %v940
    %v952 = vmul.f32 %v951, %v940
    %v953 = vmul.f32 %v952, %v951
    %v954 = vmul.f32 0.5, %v953
    %v955 = vsub.f32 1.5, %v954
    %v956 = vmul.f32 %v951, %v955
    %vm957 = vweird.f32 %v940
    %vm958 = vweird.f32 %v951
    %vm959 = vmor %vm957, %vm958
    %v960 = vsel %vm959, %v951, %v956
    %v961 = vmul.f32 %v742, %v950
    %v962 = vmul.f32 %v743, %v960
    %v963 = vperm.slane %v928, 0
    %v964 = vmul.f32 %v961, %v963
    %v965 = vmul.f32 %v962, %v963
    %s966 = scalar_lea.vmem %s8, 64
    %v967 = vld [vmem:[%s966] sm:$0xff]
    %v968 = vld [vmem:[%s966 + $0x8] sm:$0xff]
    %v969 = vld [vmem:[%s966 + $0x10] sm:$0xff]
    %v970 = vld [vmem:[%s966 + $0x18] sm:$0xff]
    %v971 = vld [vmem:[%s966 + $0x20] sm:$0xff]
    %v972 = vld [vmem:[%s966 + $0x28] sm:$0xff]
    %v973 = vld [vmem:[%s966 + $0x30] sm:$0xff]
    %v974 = vld [vmem:[%s966 + $0x38] sm:$0xff]
    %v975 = vld [vmem:[%s9 + $0x1] sm:$0x1]
    %v976 = vperm.slane %v975, 0
    %v978 = vsel %vm88, %v964, 0
    %v981 = vsel %vm88, %v965, 0
    %983 = vmatpush.msra.mxu0 0.0
    %984 = vmatpush.msra.mxu0 0.0
    %985 = vmatpush.msra.mxu0 0.0
    %986 = vmatpush.msra.mxu0 0.0
    %987 = vmatpush.msra.mxu0 0.0
    %988 = vmatpush.msra.mxu0 0.0
    %989 = vmatpush.msra.mxu0 0.0
    %990 = vmatpush.msra.mxu0 0.0
    %991 = vmatpush.msra.mxu0 %v974
    %992 = vmatpush.msra.mxu0 %v973
    %993 = vmatpush.msra.mxu0 %v972
    %994 = vmatpush.msra.mxu0 %v971
    %995 = vmatpush.msra.mxu0 %v970
    %996 = vmatpush.msra.mxu0 %v969
    %997 = vmatpush.msra.mxu0 %v968
    %998 = vmatpush.msra.mxu0 %v967
    %999 = vmatmul.f32.gmra.mxu0 %v978
    %v1000 = vpop.f32.mrf.mxu0
    %v1001 = vadd.f32 %v976, %v1000
    %1002 = vmatmul.f32.gmra.mxu0 %v981
    %v1003 = vpop.f32.mrf.mxu0
    %v1004 = vadd.f32 %v976, %v1003
    %1005 = vdwg.mxu0
    %v1006 = vmax.f32 %v1001, 0.0
    %v1007 = vmax.f32 %v1004, 0.0
    %v1008 = vmul.f32 %v1006, %v1006
    %v1009 = vmul.f32 %v1007, %v1007
    %s1010 = scalar_lea.vmem %s10, 128
    %v1011 = vld [vmem:[%s1010] sm:$0xff]
    %v1012 = vld [vmem:[%s1010 + $0x8] sm:$0xff]
    %v1013 = vld [vmem:[%s1010 + $0x10] sm:$0xff]
    %v1014 = vld [vmem:[%s1010 + $0x18] sm:$0xff]
    %v1015 = vld [vmem:[%s1010 + $0x20] sm:$0xff]
    %v1016 = vld [vmem:[%s1010 + $0x28] sm:$0xff]
    %v1017 = vld [vmem:[%s1010 + $0x30] sm:$0xff]
    %v1018 = vld [vmem:[%s1010 + $0x38] sm:$0xff]
    %v1019 = vld [vmem:[%s1010 + $0x40] sm:$0xff]
    %v1020 = vld [vmem:[%s1010 + $0x48] sm:$0xff]
    %v1021 = vld [vmem:[%s1010 + $0x50] sm:$0xff]
    %v1022 = vld [vmem:[%s1010 + $0x58] sm:$0xff]
    %v1023 = vld [vmem:[%s1010 + $0x60] sm:$0xff]
    %v1024 = vld [vmem:[%s1010 + $0x68] sm:$0xff]
    %v1025 = vld [vmem:[%s1010 + $0x70] sm:$0xff]
    %v1026 = vld [vmem:[%s1010 + $0x78] sm:$0xff]
    %v1027 = vld [vmem:[%s11 + $0x1] sm:$0x1]
    %v1028 = vperm.slane %v1027, 0
    %1029 = vmatpush.msra.mxu0 %v1026
    %1030 = vmatpush.msra.mxu0 %v1025
    %1031 = vmatpush.msra.mxu0 %v1024
    %1032 = vmatpush.msra.mxu0 %v1023
    %1033 = vmatpush.msra.mxu0 %v1022
    %1034 = vmatpush.msra.mxu0 %v1021
    %1035 = vmatpush.msra.mxu0 %v1020
    %1036 = vmatpush.msra.mxu0 %v1019
    %1037 = vmatpush.msra.mxu0 %v1018
    %1038 = vmatpush.msra.mxu0 %v1017
    %1039 = vmatpush.msra.mxu0 %v1016
    %1040 = vmatpush.msra.mxu0 %v1015
    %1041 = vmatpush.msra.mxu0 %v1014
    %1042 = vmatpush.msra.mxu0 %v1013
    %1043 = vmatpush.msra.mxu0 %v1012
    %1044 = vmatpush.msra.mxu0 %v1011
    %1045 = vmatmul.f32.gmra.mxu0 %v1008
    %v1046 = vpop.f32.mrf.mxu0
    %v1047 = vadd.f32 %v1028, %v1046
    %1048 = vmatmul.f32.gmra.mxu0 %v1009
    %v1049 = vpop.f32.mrf.mxu0
    %v1050 = vadd.f32 %v1028, %v1049
    %1051 = vdwg.mxu0
    %1052 = vset.pattern.permute.xlu0 5
    %1053 = vperm.xlu0 %1052, %v682
    %v1054 = vpop.permute.xlu0 %1053
    %1056 = vset.pattern.permute.xlu0 5
    %1057 = vperm.xlu0 %1056, %v683
    %v1058 = vpop.permute.xlu0 %1057
    %v1060 = vmul.f32 %v1054, %v1047
    %v1061 = vmul.f32 %v1058, %v1050
    %v1062 = vadd.f32 %v788, %v1060
    %v1063 = vadd.f32 %v789, %v1061
    %1064 = vset.pattern.permute.xlu0 5
    %1065 = vperm.xlu0 %1064, %v684
    %v1066 = vpop.permute.xlu0 %1065
    %1068 = vset.pattern.permute.xlu0 5
    %1069 = vperm.xlu0 %1068, %v685
    %v1070 = vpop.permute.xlu0 %1069
    %v1072 = vmul.f32 %v1066, %v1047
    %v1073 = vmul.f32 %v1070, %v1050
    %v1074 = vadd.f32 %v834, %v1072
    %v1075 = vadd.f32 %v835, %v1073
    %1076 = vset.pattern.permute.xlu0 5
    %1077 = vperm.xlu0 %1076, %v686
    %v1078 = vpop.permute.xlu0 %1077
    %1080 = vset.pattern.permute.xlu0 5
    %1081 = vperm.xlu0 %1080, %v687
    %v1082 = vpop.permute.xlu0 %1081
    %v1084 = vmul.f32 %v1078, %v1047
    %v1085 = vmul.f32 %v1082, %v1050
    %v1086 = vadd.f32 %v880, %v1084
    %v1087 = vadd.f32 %v881, %v1085
    %1088 = vset.pattern.permute.xlu0 5
    %1089 = vperm.xlu0 %1088, %v688
    %v1090 = vpop.permute.xlu0 %1089
    %1092 = vset.pattern.permute.xlu0 5
    %1093 = vperm.xlu0 %1092, %v689
    %v1094 = vpop.permute.xlu0 %1093
    %v1096 = vmul.f32 %v1090, %v1047
    %v1097 = vmul.f32 %v1094, %v1050
    %v1098 = vadd.f32 %v926, %v1096
    %v1099 = vadd.f32 %v927, %v1097
    %v1100 = vld [vmem:[%s3 + $0x2] sm:$0x1]
    %v1101 = vmul.f32 %v1062, %v1062
    %v1102 = vmul.f32 %v1063, %v1063
    %v1103 = vmul.f32 %v1074, %v1074
    %v1104 = vmul.f32 %v1075, %v1075
    %v1105 = vmul.f32 %v1086, %v1086
    %v1106 = vmul.f32 %v1087, %v1087
    %v1107 = vmul.f32 %v1098, %v1098
    %v1108 = vmul.f32 %v1099, %v1099
    %v1109 = vsel %vm88, %v1101, 0.0
    %1110 = vadd.xlane.f32.xlu0 %v1109
    %v1111 = vpop.xlane.xlu0 %1110
    %v1112 = vsel %vm88, %v1102, 0.0
    %1113 = vadd.xlane.f32.xlu0 %v1112
    %v1114 = vpop.xlane.xlu0 %1113
    %v1115 = vsel %vm88, %v1103, 0.0
    %1116 = vadd.xlane.f32.xlu0 %v1115
    %v1117 = vpop.xlane.xlu0 %1116
    %v1118 = vsel %vm88, %v1104, 0.0
    %1119 = vadd.xlane.f32.xlu0 %v1118
    %v1120 = vpop.xlane.xlu0 %1119
    %v1121 = vsel %vm88, %v1105, 0.0
    %1122 = vadd.xlane.f32.xlu0 %v1121
    %v1123 = vpop.xlane.xlu0 %1122
    %v1124 = vsel %vm88, %v1106, 0.0
    %1125 = vadd.xlane.f32.xlu0 %v1124
    %v1126 = vpop.xlane.xlu0 %1125
    %v1127 = vsel %vm88, %v1107, 0.0
    %1128 = vadd.xlane.f32.xlu0 %v1127
    %v1129 = vpop.xlane.xlu0 %1128
    %v1130 = vsel %vm88, %v1108, 0.0
    %1131 = vadd.xlane.f32.xlu0 %v1130
    %v1132 = vpop.xlane.xlu0 %1131
    %v1133 = vmul.f32 %v1111, %v101
    %v1134 = vmul.f32 %v1114, %v101
    %v1135 = vmul.f32 %v1117, %v101
    %v1136 = vmul.f32 %v1120, %v101
    %v1137 = vmul.f32 %v1123, %v101
    %v1138 = vmul.f32 %v1126, %v101
    %v1139 = vmul.f32 %v1129, %v101
    %v1140 = vmul.f32 %v1132, %v101
    %v1141 = vadd.f32 %v1133, 1.1920929e-07
    %v1142 = vadd.f32 %v1134, 1.1920929e-07
    %v1143 = vadd.f32 %v1135, 1.1920929e-07
    %v1144 = vadd.f32 %v1136, 1.1920929e-07
    %v1145 = vadd.f32 %v1137, 1.1920929e-07
    %v1146 = vadd.f32 %v1138, 1.1920929e-07
    %v1147 = vadd.f32 %v1139, 1.1920929e-07
    %v1148 = vadd.f32 %v1140, 1.1920929e-07
    %v1149 = vrsqrt.pop %v1141
    %v1150 = vmul.f32 %v1149, %v1141
    %v1151 = vmul.f32 %v1150, %v1149
    %v1152 = vmul.f32 0.5, %v1151
    %v1153 = vsub.f32 1.5, %v1152
    %v1154 = vmul.f32 %v1149, %v1153
    %vm1155 = vweird.f32 %v1141
    %vm1156 = vweird.f32 %v1149
    %vm1157 = vmor %vm1155, %vm1156
    %v1158 = vsel %vm1157, %v1149, %v1154
    %v1159 = vrsqrt.pop %v1142
    %v1160 = vmul.f32 %v1159, %v1142
    %v1161 = vmul.f32 %v1160, %v1159
    %v1162 = vmul.f32 0.5, %v1161
    %v1163 = vsub.f32 1.5, %v1162
    %v1164 = vmul.f32 %v1159, %v1163
    %vm1165 = vweird.f32 %v1142
    %vm1166 = vweird.f32 %v1159
    %vm1167 = vmor %vm1165, %vm1166
    %v1168 = vsel %vm1167, %v1159, %v1164
    %v1169 = vrsqrt.pop %v1143
    %v1170 = vmul.f32 %v1169, %v1143
    %v1171 = vmul.f32 %v1170, %v1169
    %v1172 = vmul.f32 0.5, %v1171
    %v1173 = vsub.f32 1.5, %v1172
    %v1174 = vmul.f32 %v1169, %v1173
    %vm1175 = vweird.f32 %v1143
    %vm1176 = vweird.f32 %v1169
    %vm1177 = vmor %vm1175, %vm1176
    %v1178 = vsel %vm1177, %v1169, %v1174
    %v1179 = vrsqrt.pop %v1144
    %v1180 = vmul.f32 %v1179, %v1144
    %v1181 = vmul.f32 %v1180, %v1179
    %v1182 = vmul.f32 0.5, %v1181
    %v1183 = vsub.f32 1.5, %v1182
    %v1184 = vmul.f32 %v1179, %v1183
    %vm1185 = vweird.f32 %v1144
    %vm1186 = vweird.f32 %v1179
    %vm1187 = vmor %vm1185, %vm1186
    %v1188 = vsel %vm1187, %v1179, %v1184
    %v1189 = vrsqrt.pop %v1145
    %v1190 = vmul.f32 %v1189, %v1145
    %v1191 = vmul.f32 %v1190, %v1189
    %v1192 = vmul.f32 0.5, %v1191
    %v1193 = vsub.f32 1.5, %v1192
    %v1194 = vmul.f32 %v1189, %v1193
    %vm1195 = vweird.f32 %v1145
    %vm1196 = vweird.f32 %v1189
    %vm1197 = vmor %vm1195, %vm1196
    %v1198 = vsel %vm1197, %v1189, %v1194
    %v1199 = vrsqrt.pop %v1146
    %v1200 = vmul.f32 %v1199, %v1146
    %v1201 = vmul.f32 %v1200, %v1199
    %v1202 = vmul.f32 0.5, %v1201
    %v1203 = vsub.f32 1.5, %v1202
    %v1204 = vmul.f32 %v1199, %v1203
    %vm1205 = vweird.f32 %v1146
    %vm1206 = vweird.f32 %v1199
    %vm1207 = vmor %vm1205, %vm1206
    %v1208 = vsel %vm1207, %v1199, %v1204
    %v1209 = vrsqrt.pop %v1147
    %v1210 = vmul.f32 %v1209, %v1147
    %v1211 = vmul.f32 %v1210, %v1209
    %v1212 = vmul.f32 0.5, %v1211
    %v1213 = vsub.f32 1.5, %v1212
    %v1214 = vmul.f32 %v1209, %v1213
    %vm1215 = vweird.f32 %v1147
    %vm1216 = vweird.f32 %v1209
    %vm1217 = vmor %vm1215, %vm1216
    %v1218 = vsel %vm1217, %v1209, %v1214
    %v1219 = vrsqrt.pop %v1148
    %v1220 = vmul.f32 %v1219, %v1148
    %v1221 = vmul.f32 %v1220, %v1219
    %v1222 = vmul.f32 0.5, %v1221
    %v1223 = vsub.f32 1.5, %v1222
    %v1224 = vmul.f32 %v1219, %v1223
    %vm1225 = vweird.f32 %v1148
    %vm1226 = vweird.f32 %v1219
    %vm1227 = vmor %vm1225, %vm1226
    %v1228 = vsel %vm1227, %v1219, %v1224
    %v1229 = vmul.f32 %v1062, %v1158
    %v1230 = vmul.f32 %v1063, %v1168
    %v1231 = vmul.f32 %v1074, %v1178
    %v1232 = vmul.f32 %v1075, %v1188
    %v1233 = vmul.f32 %v1086, %v1198
    %v1234 = vmul.f32 %v1087, %v1208
    %v1235 = vmul.f32 %v1098, %v1218
    %v1236 = vmul.f32 %v1099, %v1228
    %v1237 = vperm.slane %v1100, 0
    %v1238 = vmul.f32 %v1229, %v1237
    %v1239 = vmul.f32 %v1230, %v1237
    %v1240 = vmul.f32 %v1231, %v1237
    %v1241 = vmul.f32 %v1232, %v1237
    %v1242 = vmul.f32 %v1233, %v1237
    %v1243 = vmul.f32 %v1234, %v1237
    %v1244 = vmul.f32 %v1235, %v1237
    %v1245 = vmul.f32 %v1236, %v1237
    %s1246 = scalar_lea.vmem %s4, 128
    %v1247 = vld [vmem:[%s1246] sm:$0xff]
    %v1248 = vld [vmem:[%s1246 + $0x8] sm:$0xff]
    %v1249 = vld [vmem:[%s1246 + $0x10] sm:$0xff]
    %v1250 = vld [vmem:[%s1246 + $0x18] sm:$0xff]
    %v1251 = vld [vmem:[%s1246 + $0x20] sm:$0xff]
    %v1252 = vld [vmem:[%s1246 + $0x28] sm:$0xff]
    %v1253 = vld [vmem:[%s1246 + $0x30] sm:$0xff]
    %v1254 = vld [vmem:[%s1246 + $0x38] sm:$0xff]
    %v1256 = vsel %vm88, %v1238, 0
    %v1259 = vsel %vm88, %v1239, 0
    %v1262 = vsel %vm88, %v1240, 0
    %v1265 = vsel %vm88, %v1241, 0
    %v1268 = vsel %vm88, %v1242, 0
    %v1271 = vsel %vm88, %v1243, 0
    %v1274 = vsel %vm88, %v1244, 0
    %v1277 = vsel %vm88, %v1245, 0
    %1279 = vmatpush.msra.mxu0 0.0
    %1280 = vmatpush.msra.mxu0 0.0
    %1281 = vmatpush.msra.mxu0 0.0
    %1282 = vmatpush.msra.mxu0 0.0
    %1283 = vmatpush.msra.mxu0 0.0
    %1284 = vmatpush.msra.mxu0 0.0
    %1285 = vmatpush.msra.mxu0 0.0
    %1286 = vmatpush.msra.mxu0 0.0
    %1287 = vmatpush.msra.mxu0 %v1254
    %1288 = vmatpush.msra.mxu0 %v1253
    %1289 = vmatpush.msra.mxu0 %v1252
    %1290 = vmatpush.msra.mxu0 %v1251
    %1291 = vmatpush.msra.mxu0 %v1250
    %1292 = vmatpush.msra.mxu0 %v1249
    %1293 = vmatpush.msra.mxu0 %v1248
    %1294 = vmatpush.msra.mxu0 %v1247
    %1295 = vmatmul.f32.gmra.mxu0 %v1256
    %v1296 = vpop.f32.mrf.mxu0
    %v1297 = vadd.f32 0.0, %v1296
    %1298 = vmatmul.f32.gmra.mxu0 %v1259
    %v1299 = vpop.f32.mrf.mxu0
    %v1300 = vadd.f32 0.0, %v1299
    %1301 = vmatmul.f32.gmra.mxu0 %v1262
    %v1302 = vpop.f32.mrf.mxu0
    %v1303 = vadd.f32 0.0, %v1302
    %1304 = vmatmul.f32.gmra.mxu0 %v1265
    %v1305 = vpop.f32.mrf.mxu0
    %v1306 = vadd.f32 0.0, %v1305
    %1307 = vmatmul.f32.gmra.mxu0 %v1268
    %v1308 = vpop.f32.mrf.mxu0
    %v1309 = vadd.f32 0.0, %v1308
    %1310 = vmatmul.f32.gmra.mxu0 %v1271
    %v1311 = vpop.f32.mrf.mxu0
    %v1312 = vadd.f32 0.0, %v1311
    %1313 = vmatmul.f32.gmra.mxu0 %v1274
    %v1314 = vpop.f32.mrf.mxu0
    %v1315 = vadd.f32 0.0, %v1314
    %1316 = vmatmul.f32.gmra.mxu0 %v1277
    %v1317 = vpop.f32.mrf.mxu0
    %v1318 = vadd.f32 0.0, %v1317
    %1319 = vdwg.mxu0
    %v1320 = vtanh.pop %v1297
    %v1321 = vtanh.pop %v1300
    %v1322 = vtanh.pop %v1303
    %v1323 = vtanh.pop %v1306
    %v1324 = vtanh.pop %v1309
    %v1325 = vtanh.pop %v1312
    %v1326 = vtanh.pop %v1315
    %v1327 = vtanh.pop %v1318
    %s1328 = scalar_lea.vmem %s5, 2
    %v1329 = vld [vmem:[%s1328] sm:$0x1]
    %v1331 = vperm.slane %v1329, 0
    %v1333 = vmul.f32 %v1320, %v1331
    %v1334 = vmul.f32 %v1321, %v1331
    %v1335 = vmul.f32 %v1322, %v1331
    %v1336 = vmul.f32 %v1323, %v1331
    %v1337 = vmul.f32 %v1324, %v1331
    %v1338 = vmul.f32 %v1325, %v1331
    %v1339 = vmul.f32 %v1326, %v1331
    %v1340 = vmul.f32 %v1327, %v1331
    %s1341 = scalar_lea.vmem %s6, 128
    %v1342 = vld [vmem:[%s1341] sm:$0xff]
    %v1343 = vld [vmem:[%s1341 + $0x8] sm:$0xff]
    %v1344 = vld [vmem:[%s1341 + $0x10] sm:$0xff]
    %v1345 = vld [vmem:[%s1341 + $0x18] sm:$0xff]
    %v1346 = vld [vmem:[%s1341 + $0x20] sm:$0xff]
    %v1347 = vld [vmem:[%s1341 + $0x28] sm:$0xff]
    %v1348 = vld [vmem:[%s1341 + $0x30] sm:$0xff]
    %v1349 = vld [vmem:[%s1341 + $0x38] sm:$0xff]
    %v1350 = vadd.f32 %v1333, %v1342
    %v1351 = vadd.f32 %v1334, %v1343
    %v1352 = vadd.f32 %v1335, %v1344
    %v1353 = vadd.f32 %v1336, %v1345
    %v1354 = vadd.f32 %v1337, %v1346
    %v1355 = vadd.f32 %v1338, %v1347
    %v1356 = vadd.f32 %v1339, %v1348
    %v1357 = vadd.f32 %v1340, %v1349
    %1359 = vset.pattern.permute.xlu0 0
    %1360 = vperm.xlu0 %1359, %v1350
    %v1361 = vpop.permute.xlu0 %1360
    %1364 = vset.pattern.permute.xlu0 0
    %1365 = vperm.xlu0 %1364, %v1351
    %v1366 = vpop.permute.xlu0 %1365
    %v1368 = vmul.f32 %v1361, %v1062
    %v1369 = vmul.f32 %v1366, %v1063
    %1371 = vset.pattern.permute.xlu0 0
    %1372 = vperm.xlu0 %1371, %v1352
    %v1373 = vpop.permute.xlu0 %1372
    %1376 = vset.pattern.permute.xlu0 0
    %1377 = vperm.xlu0 %1376, %v1353
    %v1378 = vpop.permute.xlu0 %1377
    %v1380 = vmul.f32 %v1373, %v1074
    %v1381 = vmul.f32 %v1378, %v1075
    %v1382 = vadd.f32 %v1368, %v1380
    %v1383 = vadd.f32 %v1369, %v1381
    %1385 = vset.pattern.permute.xlu0 0
    %1386 = vperm.xlu0 %1385, %v1354
    %v1387 = vpop.permute.xlu0 %1386
    %1390 = vset.pattern.permute.xlu0 0
    %1391 = vperm.xlu0 %1390, %v1355
    %v1392 = vpop.permute.xlu0 %1391
    %v1394 = vmul.f32 %v1387, %v1086
    %v1395 = vmul.f32 %v1392, %v1087
    %v1396 = vadd.f32 %v1382, %v1394
    %v1397 = vadd.f32 %v1383, %v1395
    %1399 = vset.pattern.permute.xlu0 0
    %1400 = vperm.xlu0 %1399, %v1356
    %v1401 = vpop.permute.xlu0 %1400
    %1404 = vset.pattern.permute.xlu0 0
    %1405 = vperm.xlu0 %1404, %v1357
    %v1406 = vpop.permute.xlu0 %1405
    %v1408 = vmul.f32 %v1401, %v1098
    %v1409 = vmul.f32 %v1406, %v1099
    %v1410 = vadd.f32 %v1396, %v1408
    %v1411 = vadd.f32 %v1397, %v1409
    %1412 = vset.pattern.permute.xlu0 1
    %1413 = vperm.xlu0 %1412, %v1350
    %v1414 = vpop.permute.xlu0 %1413
    %1416 = vset.pattern.permute.xlu0 1
    %1417 = vperm.xlu0 %1416, %v1351
    %v1418 = vpop.permute.xlu0 %1417
    %v1420 = vmul.f32 %v1414, %v1062
    %v1421 = vmul.f32 %v1418, %v1063
    %1422 = vset.pattern.permute.xlu0 1
    %1423 = vperm.xlu0 %1422, %v1352
    %v1424 = vpop.permute.xlu0 %1423
    %1426 = vset.pattern.permute.xlu0 1
    %1427 = vperm.xlu0 %1426, %v1353
    %v1428 = vpop.permute.xlu0 %1427
    %v1430 = vmul.f32 %v1424, %v1074
    %v1431 = vmul.f32 %v1428, %v1075
    %v1432 = vadd.f32 %v1420, %v1430
    %v1433 = vadd.f32 %v1421, %v1431
    %1434 = vset.pattern.permute.xlu0 1
    %1435 = vperm.xlu0 %1434, %v1354
    %v1436 = vpop.permute.xlu0 %1435
    %1438 = vset.pattern.permute.xlu0 1
    %1439 = vperm.xlu0 %1438, %v1355
    %v1440 = vpop.permute.xlu0 %1439
    %v1442 = vmul.f32 %v1436, %v1086
    %v1443 = vmul.f32 %v1440, %v1087
    %v1444 = vadd.f32 %v1432, %v1442
    %v1445 = vadd.f32 %v1433, %v1443
    %1446 = vset.pattern.permute.xlu0 1
    %1447 = vperm.xlu0 %1446, %v1356
    %v1448 = vpop.permute.xlu0 %1447
    %1450 = vset.pattern.permute.xlu0 1
    %1451 = vperm.xlu0 %1450, %v1357
    %v1452 = vpop.permute.xlu0 %1451
    %v1454 = vmul.f32 %v1448, %v1098
    %v1455 = vmul.f32 %v1452, %v1099
    %v1456 = vadd.f32 %v1444, %v1454
    %v1457 = vadd.f32 %v1445, %v1455
    %1458 = vset.pattern.permute.xlu0 2
    %1459 = vperm.xlu0 %1458, %v1350
    %v1460 = vpop.permute.xlu0 %1459
    %1462 = vset.pattern.permute.xlu0 2
    %1463 = vperm.xlu0 %1462, %v1351
    %v1464 = vpop.permute.xlu0 %1463
    %v1466 = vmul.f32 %v1460, %v1062
    %v1467 = vmul.f32 %v1464, %v1063
    %1468 = vset.pattern.permute.xlu0 2
    %1469 = vperm.xlu0 %1468, %v1352
    %v1470 = vpop.permute.xlu0 %1469
    %1472 = vset.pattern.permute.xlu0 2
    %1473 = vperm.xlu0 %1472, %v1353
    %v1474 = vpop.permute.xlu0 %1473
    %v1476 = vmul.f32 %v1470, %v1074
    %v1477 = vmul.f32 %v1474, %v1075
    %v1478 = vadd.f32 %v1466, %v1476
    %v1479 = vadd.f32 %v1467, %v1477
    %1480 = vset.pattern.permute.xlu0 2
    %1481 = vperm.xlu0 %1480, %v1354
    %v1482 = vpop.permute.xlu0 %1481
    %1484 = vset.pattern.permute.xlu0 2
    %1485 = vperm.xlu0 %1484, %v1355
    %v1486 = vpop.permute.xlu0 %1485
    %v1488 = vmul.f32 %v1482, %v1086
    %v1489 = vmul.f32 %v1486, %v1087
    %v1490 = vadd.f32 %v1478, %v1488
    %v1491 = vadd.f32 %v1479, %v1489
    %1492 = vset.pattern.permute.xlu0 2
    %1493 = vperm.xlu0 %1492, %v1356
    %v1494 = vpop.permute.xlu0 %1493
    %1496 = vset.pattern.permute.xlu0 2
    %1497 = vperm.xlu0 %1496, %v1357
    %v1498 = vpop.permute.xlu0 %1497
    %v1500 = vmul.f32 %v1494, %v1098
    %v1501 = vmul.f32 %v1498, %v1099
    %v1502 = vadd.f32 %v1490, %v1500
    %v1503 = vadd.f32 %v1491, %v1501
    %1504 = vset.pattern.permute.xlu0 3
    %1505 = vperm.xlu0 %1504, %v1350
    %v1506 = vpop.permute.xlu0 %1505
    %1508 = vset.pattern.permute.xlu0 3
    %1509 = vperm.xlu0 %1508, %v1351
    %v1510 = vpop.permute.xlu0 %1509
    %v1512 = vmul.f32 %v1506, %v1062
    %v1513 = vmul.f32 %v1510, %v1063
    %1514 = vset.pattern.permute.xlu0 3
    %1515 = vperm.xlu0 %1514, %v1352
    %v1516 = vpop.permute.xlu0 %1515
    %1518 = vset.pattern.permute.xlu0 3
    %1519 = vperm.xlu0 %1518, %v1353
    %v1520 = vpop.permute.xlu0 %1519
    %v1522 = vmul.f32 %v1516, %v1074
    %v1523 = vmul.f32 %v1520, %v1075
    %v1524 = vadd.f32 %v1512, %v1522
    %v1525 = vadd.f32 %v1513, %v1523
    %1526 = vset.pattern.permute.xlu0 3
    %1527 = vperm.xlu0 %1526, %v1354
    %v1528 = vpop.permute.xlu0 %1527
    %1530 = vset.pattern.permute.xlu0 3
    %1531 = vperm.xlu0 %1530, %v1355
    %v1532 = vpop.permute.xlu0 %1531
    %v1534 = vmul.f32 %v1528, %v1086
    %v1535 = vmul.f32 %v1532, %v1087
    %v1536 = vadd.f32 %v1524, %v1534
    %v1537 = vadd.f32 %v1525, %v1535
    %1538 = vset.pattern.permute.xlu0 3
    %1539 = vperm.xlu0 %1538, %v1356
    %v1540 = vpop.permute.xlu0 %1539
    %1542 = vset.pattern.permute.xlu0 3
    %1543 = vperm.xlu0 %1542, %v1357
    %v1544 = vpop.permute.xlu0 %1543
    %v1546 = vmul.f32 %v1540, %v1098
    %v1547 = vmul.f32 %v1544, %v1099
    %v1548 = vadd.f32 %v1536, %v1546
    %v1549 = vadd.f32 %v1537, %v1547
    %1550 = vset.pattern.permute.xlu0 4
    %1551 = vperm.xlu0 %1550, %v1350
    %v1552 = vpop.permute.xlu0 %1551
    %1554 = vset.pattern.permute.xlu0 4
    %1555 = vperm.xlu0 %1554, %v1351
    %v1556 = vpop.permute.xlu0 %1555
    %v1558 = vmul.f32 %v1552, %v1062
    %v1559 = vmul.f32 %v1556, %v1063
    %1560 = vset.pattern.permute.xlu0 4
    %1561 = vperm.xlu0 %1560, %v1352
    %v1562 = vpop.permute.xlu0 %1561
    %1564 = vset.pattern.permute.xlu0 4
    %1565 = vperm.xlu0 %1564, %v1353
    %v1566 = vpop.permute.xlu0 %1565
    %v1568 = vmul.f32 %v1562, %v1074
    %v1569 = vmul.f32 %v1566, %v1075
    %v1570 = vadd.f32 %v1558, %v1568
    %v1571 = vadd.f32 %v1559, %v1569
    %1572 = vset.pattern.permute.xlu0 4
    %1573 = vperm.xlu0 %1572, %v1354
    %v1574 = vpop.permute.xlu0 %1573
    %1576 = vset.pattern.permute.xlu0 4
    %1577 = vperm.xlu0 %1576, %v1355
    %v1578 = vpop.permute.xlu0 %1577
    %v1580 = vmul.f32 %v1574, %v1086
    %v1581 = vmul.f32 %v1578, %v1087
    %v1582 = vadd.f32 %v1570, %v1580
    %v1583 = vadd.f32 %v1571, %v1581
    %1584 = vset.pattern.permute.xlu0 4
    %1585 = vperm.xlu0 %1584, %v1356
    %v1586 = vpop.permute.xlu0 %1585
    %1588 = vset.pattern.permute.xlu0 4
    %1589 = vperm.xlu0 %1588, %v1357
    %v1590 = vpop.permute.xlu0 %1589
    %v1592 = vmul.f32 %v1586, %v1098
    %v1593 = vmul.f32 %v1590, %v1099
    %v1594 = vadd.f32 %v1582, %v1592
    %v1595 = vadd.f32 %v1583, %v1593
    %v1596 = vld [vmem:[%s7 + $0x2] sm:$0x1]
    %v1597 = vmul.f32 %v1410, %v1410
    %v1598 = vmul.f32 %v1411, %v1411
    %v1599 = vsel %vm88, %v1597, 0.0
    %1600 = vadd.xlane.f32.xlu0 %v1599
    %v1601 = vpop.xlane.xlu0 %1600
    %v1602 = vsel %vm88, %v1598, 0.0
    %1603 = vadd.xlane.f32.xlu0 %v1602
    %v1604 = vpop.xlane.xlu0 %1603
    %v1605 = vmul.f32 %v1601, %v101
    %v1606 = vmul.f32 %v1604, %v101
    %v1607 = vadd.f32 %v1605, 1.1920929e-07
    %v1608 = vadd.f32 %v1606, 1.1920929e-07
    %v1609 = vrsqrt.pop %v1607
    %v1610 = vmul.f32 %v1609, %v1607
    %v1611 = vmul.f32 %v1610, %v1609
    %v1612 = vmul.f32 0.5, %v1611
    %v1613 = vsub.f32 1.5, %v1612
    %v1614 = vmul.f32 %v1609, %v1613
    %vm1615 = vweird.f32 %v1607
    %vm1616 = vweird.f32 %v1609
    %vm1617 = vmor %vm1615, %vm1616
    %v1618 = vsel %vm1617, %v1609, %v1614
    %v1619 = vrsqrt.pop %v1608
    %v1620 = vmul.f32 %v1619, %v1608
    %v1621 = vmul.f32 %v1620, %v1619
    %v1622 = vmul.f32 0.5, %v1621
    %v1623 = vsub.f32 1.5, %v1622
    %v1624 = vmul.f32 %v1619, %v1623
    %vm1625 = vweird.f32 %v1608
    %vm1626 = vweird.f32 %v1619
    %vm1627 = vmor %vm1625, %vm1626
    %v1628 = vsel %vm1627, %v1619, %v1624
    %v1629 = vmul.f32 %v1410, %v1618
    %v1630 = vmul.f32 %v1411, %v1628
    %v1631 = vperm.slane %v1596, 0
    %v1632 = vmul.f32 %v1629, %v1631
    %v1633 = vmul.f32 %v1630, %v1631
    %s1634 = scalar_lea.vmem %s8, 128
    %v1635 = vld [vmem:[%s1634] sm:$0xff]
    %v1636 = vld [vmem:[%s1634 + $0x8] sm:$0xff]
    %v1637 = vld [vmem:[%s1634 + $0x10] sm:$0xff]
    %v1638 = vld [vmem:[%s1634 + $0x18] sm:$0xff]
    %v1639 = vld [vmem:[%s1634 + $0x20] sm:$0xff]
    %v1640 = vld [vmem:[%s1634 + $0x28] sm:$0xff]
    %v1641 = vld [vmem:[%s1634 + $0x30] sm:$0xff]
    %v1642 = vld [vmem:[%s1634 + $0x38] sm:$0xff]
    %v1643 = vld [vmem:[%s9 + $0x2] sm:$0x1]
    %v1644 = vperm.slane %v1643, 0
    %v1646 = vsel %vm88, %v1632, 0
    %v1649 = vsel %vm88, %v1633, 0
    %1651 = vmatpush.msra.mxu0 0.0
    %1652 = vmatpush.msra.mxu0 0.0
    %1653 = vmatpush.msra.mxu0 0.0
    %1654 = vmatpush.msra.mxu0 0.0
    %1655 = vmatpush.msra.mxu0 0.0
    %1656 = vmatpush.msra.mxu0 0.0
    %1657 = vmatpush.msra.mxu0 0.0
    %1658 = vmatpush.msra.mxu0 0.0
    %1659 = vmatpush.msra.mxu0 %v1642
    %1660 = vmatpush.msra.mxu0 %v1641
    %1661 = vmatpush.msra.mxu0 %v1640
    %1662 = vmatpush.msra.mxu0 %v1639
    %1663 = vmatpush.msra.mxu0 %v1638
    %1664 = vmatpush.msra.mxu0 %v1637
    %1665 = vmatpush.msra.mxu0 %v1636
    %1666 = vmatpush.msra.mxu0 %v1635
    %1667 = vmatmul.f32.gmra.mxu0 %v1646
    %v1668 = vpop.f32.mrf.mxu0
    %v1669 = vadd.f32 %v1644, %v1668
    %1670 = vmatmul.f32.gmra.mxu0 %v1649
    %v1671 = vpop.f32.mrf.mxu0
    %v1672 = vadd.f32 %v1644, %v1671
    %1673 = vdwg.mxu0
    %v1674 = vmax.f32 %v1669, 0.0
    %v1675 = vmax.f32 %v1672, 0.0
    %v1676 = vmul.f32 %v1674, %v1674
    %v1677 = vmul.f32 %v1675, %v1675
    %s1678 = scalar_lea.vmem %s10, 256
    %v1679 = vld [vmem:[%s1678] sm:$0xff]
    %v1680 = vld [vmem:[%s1678 + $0x8] sm:$0xff]
    %v1681 = vld [vmem:[%s1678 + $0x10] sm:$0xff]
    %v1682 = vld [vmem:[%s1678 + $0x18] sm:$0xff]
    %v1683 = vld [vmem:[%s1678 + $0x20] sm:$0xff]
    %v1684 = vld [vmem:[%s1678 + $0x28] sm:$0xff]
    %v1685 = vld [vmem:[%s1678 + $0x30] sm:$0xff]
    %v1686 = vld [vmem:[%s1678 + $0x38] sm:$0xff]
    %v1687 = vld [vmem:[%s1678 + $0x40] sm:$0xff]
    %v1688 = vld [vmem:[%s1678 + $0x48] sm:$0xff]
    %v1689 = vld [vmem:[%s1678 + $0x50] sm:$0xff]
    %v1690 = vld [vmem:[%s1678 + $0x58] sm:$0xff]
    %v1691 = vld [vmem:[%s1678 + $0x60] sm:$0xff]
    %v1692 = vld [vmem:[%s1678 + $0x68] sm:$0xff]
    %v1693 = vld [vmem:[%s1678 + $0x70] sm:$0xff]
    %v1694 = vld [vmem:[%s1678 + $0x78] sm:$0xff]
    %v1695 = vld [vmem:[%s11 + $0x2] sm:$0x1]
    %v1696 = vperm.slane %v1695, 0
    %1697 = vmatpush.msra.mxu0 %v1694
    %1698 = vmatpush.msra.mxu0 %v1693
    %1699 = vmatpush.msra.mxu0 %v1692
    %1700 = vmatpush.msra.mxu0 %v1691
    %1701 = vmatpush.msra.mxu0 %v1690
    %1702 = vmatpush.msra.mxu0 %v1689
    %1703 = vmatpush.msra.mxu0 %v1688
    %1704 = vmatpush.msra.mxu0 %v1687
    %1705 = vmatpush.msra.mxu0 %v1686
    %1706 = vmatpush.msra.mxu0 %v1685
    %1707 = vmatpush.msra.mxu0 %v1684
    %1708 = vmatpush.msra.mxu0 %v1683
    %1709 = vmatpush.msra.mxu0 %v1682
    %1710 = vmatpush.msra.mxu0 %v1681
    %1711 = vmatpush.msra.mxu0 %v1680
    %1712 = vmatpush.msra.mxu0 %v1679
    %1713 = vmatmul.f32.gmra.mxu0 %v1676
    %v1714 = vpop.f32.mrf.mxu0
    %v1715 = vadd.f32 %v1696, %v1714
    %1716 = vmatmul.f32.gmra.mxu0 %v1677
    %v1717 = vpop.f32.mrf.mxu0
    %v1718 = vadd.f32 %v1696, %v1717
    %1719 = vdwg.mxu0
    %1720 = vset.pattern.permute.xlu0 5
    %1721 = vperm.xlu0 %1720, %v1350
    %v1722 = vpop.permute.xlu0 %1721
    %1724 = vset.pattern.permute.xlu0 5
    %1725 = vperm.xlu0 %1724, %v1351
    %v1726 = vpop.permute.xlu0 %1725
    %v1728 = vmul.f32 %v1722, %v1715
    %v1729 = vmul.f32 %v1726, %v1718
    %v1730 = vadd.f32 %v1456, %v1728
    %v1731 = vadd.f32 %v1457, %v1729
    %1732 = vset.pattern.permute.xlu0 5
    %1733 = vperm.xlu0 %1732, %v1352
    %v1734 = vpop.permute.xlu0 %1733
    %1736 = vset.pattern.permute.xlu0 5
    %1737 = vperm.xlu0 %1736, %v1353
    %v1738 = vpop.permute.xlu0 %1737
    %v1740 = vmul.f32 %v1734, %v1715
    %v1741 = vmul.f32 %v1738, %v1718
    %v1742 = vadd.f32 %v1502, %v1740
    %v1743 = vadd.f32 %v1503, %v1741
    %1744 = vset.pattern.permute.xlu0 5
    %1745 = vperm.xlu0 %1744, %v1354
    %v1746 = vpop.permute.xlu0 %1745
    %1748 = vset.pattern.permute.xlu0 5
    %1749 = vperm.xlu0 %1748, %v1355
    %v1750 = vpop.permute.xlu0 %1749
    %v1752 = vmul.f32 %v1746, %v1715
    %v1753 = vmul.f32 %v1750, %v1718
    %v1754 = vadd.f32 %v1548, %v1752
    %v1755 = vadd.f32 %v1549, %v1753
    %1756 = vset.pattern.permute.xlu0 5
    %1757 = vperm.xlu0 %1756, %v1356
    %v1758 = vpop.permute.xlu0 %1757
    %1760 = vset.pattern.permute.xlu0 5
    %1761 = vperm.xlu0 %1760, %v1357
    %v1762 = vpop.permute.xlu0 %1761
    %v1764 = vmul.f32 %v1758, %v1715
    %v1765 = vmul.f32 %v1762, %v1718
    %v1766 = vadd.f32 %v1594, %v1764
    %v1767 = vadd.f32 %v1595, %v1765
    %v1768 = vadd.f32 %v1730, %v1742
    %v1769 = vadd.f32 %v1731, %v1743
    %v1770 = vadd.f32 %v1768, %v1754
    %v1771 = vadd.f32 %v1769, %v1755
    %v1772 = vadd.f32 %v1770, %v1766
    %v1773 = vadd.f32 %v1771, %v1767
    %v1774 = vld [vmem:[%s12] sm:$0x1]
    %v1775 = vmul.f32 %v1772, %v1772
    %v1776 = vmul.f32 %v1773, %v1773
    %v1777 = vsel %vm88, %v1775, 0.0
    %1778 = vadd.xlane.f32.xlu0 %v1777
    %v1779 = vpop.xlane.xlu0 %1778
    %v1780 = vsel %vm88, %v1776, 0.0
    %1781 = vadd.xlane.f32.xlu0 %v1780
    %v1782 = vpop.xlane.xlu0 %1781
    %v1783 = vmul.f32 %v1779, %v101
    %v1784 = vmul.f32 %v1782, %v101
    %v1785 = vadd.f32 %v1783, 1.1920929e-07
    %v1786 = vadd.f32 %v1784, 1.1920929e-07
    %v1787 = vrsqrt.pop %v1785
    %v1788 = vmul.f32 %v1787, %v1785
    %v1789 = vmul.f32 %v1788, %v1787
    %v1790 = vmul.f32 0.5, %v1789
    %v1791 = vsub.f32 1.5, %v1790
    %v1792 = vmul.f32 %v1787, %v1791
    %vm1793 = vweird.f32 %v1785
    %vm1794 = vweird.f32 %v1787
    %vm1795 = vmor %vm1793, %vm1794
    %v1796 = vsel %vm1795, %v1787, %v1792
    %v1797 = vrsqrt.pop %v1786
    %v1798 = vmul.f32 %v1797, %v1786
    %v1799 = vmul.f32 %v1798, %v1797
    %v1800 = vmul.f32 0.5, %v1799
    %v1801 = vsub.f32 1.5, %v1800
    %v1802 = vmul.f32 %v1797, %v1801
    %vm1803 = vweird.f32 %v1786
    %vm1804 = vweird.f32 %v1797
    %vm1805 = vmor %vm1803, %vm1804
    %v1806 = vsel %vm1805, %v1797, %v1802
    %v1807 = vmul.f32 %v1772, %v1796
    %v1808 = vmul.f32 %v1773, %v1806
    %v1810 = vperm.slane %v1774, 0
    %v1812 = vmul.f32 %v1807, %v1810
    %v1813 = vmul.f32 %v1808, %v1810
    %1814 = vst.msk [vmem:[#allocation2] sm:$0xff] %vm88, %v1812
    %1815 = vst.msk [vmem:[#allocation2 + $0x8] sm:$0xff] %vm88, %v1813
    // Predicated region
    $region54: #{simba_forward.1} parent=1 // pred_check
      _
    $region55: #{simba_forward.1} parent=1 // pred_check_branch
      %1817 = sbr.rel (0) target = $region57
    $region56: #{simba_forward.1} parent=1 // pred_region
      %1819 = vsyncadd [#allocation3], 0
      %s1820 = sshll.u32 [#allocation2], 4
      %s1821 = int_to_ptr.vmem [resolvable:$true] %s1820
      %s1822 = sshll.u32 %s13, 4
      %s1823 = int_to_ptr.hbm [resolvable:$true] %s1822
      %1828 = dma.vmem_to_hbm [thread:$0]  %s1821, 256, %s1823, [#allocation3], 128, 128, 8
    $region57: #{simba_forward.1} parent=1 // pred_fallthru
      _
    // Predicated region
    $region58: #{simba_forward.1} parent=1 // pred_check
      _
    $region59: #{simba_forward.1} parent=1 // pred_check_branch
      %1830 = sbr.rel (0) target = $region61
    $region60: #{simba_forward.1} parent=1 // pred_region
      %1832 = dma.done [#allocation3], 256
    $region61: #{simba_forward.1} parent=1 // pred_fallthru
      _
    %1833 = vsyncpa [#allocation3], 1

</llo_original>
